<compile_context>
chip_gen: v7x
topology: tpu7x:2x2x1
jax: 0.10.0
libtpu: 0.0.40
codegen_flags: <defaults>
</compile_context>

<pallas_src>
import functools

import jax
import jax.numpy as jnp
from jax.experimental import pallas as pl
from jax.experimental.pallas import tpu as pltpu

BN_EPS = 1e-5

# Generation-aware VMEM budget: half the physical capacity, capped at 64 MiB
# (=> 64 MiB on v5e/v6e's 128 MiB parts, 32 MiB on v7x's 64 MiB parts).
try:
    _VMEM_CAP = int(pltpu.get_tpu_info().vmem_capacity_bytes)
except Exception:  # pragma: no cover - fallback if the query is unavailable
    _VMEM_CAP = 64 * 1024 * 1024
VMEM_LIMIT = int(min(_VMEM_CAP // 2, 64 * 1024 * 1024))
MAX_ROW_TILE = 1024 if VMEM_LIMIT >= 64 * 1024 * 1024 else 512


def _round_up(x, m):
    return ((x + m - 1) // m) * m


def _pick_tile(m, max_tile=None):
    """Largest divisor of m that is a multiple of 8 and <= max_tile.

    Falls back to the largest divisor <= max_tile, then to m itself.
    # TODO(synk): masked tail handling when m has no usable divisor.
    """
    if max_tile is None:
        max_tile = MAX_ROW_TILE
    hi = min(max_tile, m)
    for t in range(hi, 7, -1):
        if m % t == 0 and t % 8 == 0:
            return t
    for t in range(hi, 0, -1):
        if m % t == 0:
            return t
    return m


def _batch_tile(n):
    """Batch tile for the head: multiple of 8 dividing n, else the full batch."""
    for t in (32, 16, 8):
        if n % t == 0:
            return t
    return n


def _vec1(d):
    # (1, D) per-channel vector, resident across a rank-1 grid.
    return pl.BlockSpec((1, d), lambda i: (0, 0))


def _vec2(d):
    # (1, D) per-channel vector, resident across a rank-2 grid.
    return pl.BlockSpec((1, d), lambda i, j: (0, 0))


# ---------------------------------------------------------------------------
# Kernel 1 (stem): tiled [TM, K] @ [K, D] + bias -> ReLU, emit BN stat partials
# ---------------------------------------------------------------------------
def matmul_relu_stats_kernel(x_ref, w_ref, b_ref, y_ref, stats_ref):
    y = jnp.dot(x_ref[...], w_ref[...], preferred_element_type=jnp.float32)
    y = jnp.maximum(y + b_ref[...], 0.0)
    y_ref[...] = y.astype(y_ref.dtype)
    d = y.shape[-1]
    s = jnp.sum(y, axis=0, keepdims=True)
    ss = jnp.sum(y * y, axis=0, keepdims=True)
    stats_ref[...] = jnp.concatenate([s, ss], axis=0).reshape(1, 2, d)


def matmul_relu_stats(x, w, b):
    m, k = x.shape
    d = w.shape[1]
    tm = _pick_tile(m)
    g = m // tm
    return pl.pallas_call(
        matmul_relu_stats_kernel,
        out_shape=(jax.ShapeDtypeStruct((m, d), jnp.bfloat16),
                   jax.ShapeDtypeStruct((g, 2, d), jnp.float32)),
        grid=(g,),
        in_specs=[
            pl.BlockSpec((tm, k), lambda i: (i, 0)),
            pl.BlockSpec((k, d), lambda i: (0, 0)),
            _vec1(d),
        ],
        out_specs=(
            pl.BlockSpec((tm, d), lambda i: (i, 0)),
            pl.BlockSpec((1, 2, d), lambda i: (i, 0, 0)),
        ),
        compiler_params=pltpu.CompilerParams(
            dimension_semantics=("parallel",),
            vmem_limit_bytes=VMEM_LIMIT),
    )(x, w, b)


# ---------------------------------------------------------------------------
# Kernel 2 (block pointwise): fused (BN-apply of dwconv output) + residual
#   (BN-apply of previous activation) -> 1x1 conv (matmul) + bias -> ReLU,
#   emit BN stat partials.  Row-tiled.  HBM-roofline bound on v6e/v7x; the
#   f32 `r` intermediate stays fused in-kernel.
# ---------------------------------------------------------------------------
def pw_block_kernel(t_ref, a_ref, dsc_ref, dsh_ref, psc_ref, psh_ref,
                    w_ref, b_ref, y_ref, stats_ref):
    r = (t_ref[...].astype(jnp.float32) * dsc_ref[...] + dsh_ref[...]
         + a_ref[...].astype(jnp.float32) * psc_ref[...] + psh_ref[...])
    y = jnp.dot(r.astype(jnp.bfloat16), w_ref[...],
                preferred_element_type=jnp.float32)
    y = jnp.maximum(y + b_ref[...], 0.0)
    y_ref[...] = y.astype(y_ref.dtype)
    d = y.shape[-1]
    s = jnp.sum(y, axis=0, keepdims=True)
    ss = jnp.sum(y * y, axis=0, keepdims=True)
    stats_ref[...] = jnp.concatenate([s, ss], axis=0).reshape(1, 2, d)


def pw_block(t, a, dsc, dsh, psc, psh, w, b):
    m, d = t.shape
    tm = _pick_tile(m)
    g = m // tm
    return pl.pallas_call(
        pw_block_kernel,
        out_shape=(jax.ShapeDtypeStruct((m, d), jnp.bfloat16),
                   jax.ShapeDtypeStruct((g, 2, d), jnp.float32)),
        grid=(g,),
        in_specs=[
            pl.BlockSpec((tm, d), lambda i: (i, 0)),
            pl.BlockSpec((tm, d), lambda i: (i, 0)),
            _vec1(d), _vec1(d), _vec1(d), _vec1(d),
            pl.BlockSpec((d, d), lambda i: (0, 0)),
            _vec1(d),
        ],
        out_specs=(
            pl.BlockSpec((tm, d), lambda i: (i, 0)),
            pl.BlockSpec((1, 2, d), lambda i: (i, 0, 0)),
        ),
        compiler_params=pltpu.CompilerParams(
            dimension_semantics=("parallel",),
            vmem_limit_bytes=VMEM_LIMIT),
    )(t, a, dsc, dsh, psc, psh, w, b)


# ---------------------------------------------------------------------------
# Kernel 3: depthwise kxk conv ('same') with fused BN-apply of its input,
#   + bias -> ReLU, emit BN stat partials.  Batch-tiled (grid over N).
#   W-shifts via pltpu.roll + column mask; H halo via in-kernel zero rows.
#   Stat reductions run on the (otherwise idle) MXU.
# ---------------------------------------------------------------------------
def dw_kernel(a_ref, sc_ref, sh_ref, w_ref, b_ref, t_ref, stats_ref,
              *, k, hp, wp):
    d = a_ref.shape[-1]
    pad = (k - 1) // 2
    mrows = hp * wp
    total = (hp + 2 * pad) * wp

    # BN-apply the previous stage on the fly (f32 elementwise math).
    x = (a_ref[...].astype(jnp.float32).reshape(mrows, d)
         * sc_ref[...] + sh_ref[...])                       # (Hp*Wp, D)

    # H halo via zero rows on the flattened view.
    # TODO(synk): for dim >= 1024, H-tile the grid / bf16 halo to shrink
    # these f32 temporaries (v7x 64 MiB VMEM).
    if pad > 0:
        zrows = jnp.zeros((pad * wp, d), jnp.float32)
        xf = jnp.concatenate([zrows, x, zrows], axis=0)     # (total, D)
    else:
        xf = x

    wv = w_ref[...]                                          # (k*k, D) f32
    b = b_ref[...]                                           # (1, D)  f32
    col = jax.lax.broadcasted_iota(jnp.int32, (total, 1), 0) % wp

    acc = jnp.zeros((mrows, d), jnp.float32)
    for dj in range(-pad, pad + 1):
        if dj == 0:
            shifted = xf
        else:
            shifted = pltpu.roll(xf, (-dj) % total, 0)       # XLU rotate
            valid = jnp.logical_and(col + dj >= 0, col + dj < wp)
            shifted = jnp.where(valid, shifted, 0.0)
        for di in range(-pad, pad + 1):
            tap = (di + pad) * k + (dj + pad)
            # Static row window; start is a multiple of wp, so the slice is a
            # vreg-aligned view when wp % 8 == 0 (slower relayout otherwise).
            start = (di + pad) * wp
            acc = acc + shifted[start:start + mrows, :] * wv[tap:tap + 1, :]

    t = jnp.maximum(acc + b, 0.0)                             # (Hp*Wp, D) f32
    t_ref[...] = t.reshape(1, hp, wp, d).astype(t_ref.dtype)

    # BN-stat partials via the idle MXU (f32 accumulation), single full-block
    # store of the stacked (sum, sumsq).
    ones = jnp.ones((1, mrows), jnp.float32)
    s = jnp.dot(ones, t, preferred_element_type=jnp.float32)       # (1, D)
    ss = jnp.dot(ones, t * t, preferred_element_type=jnp.float32)  # (1, D)
    stats_ref[...] = jnp.concatenate([s, ss], axis=0).reshape(1, 2, d)


def dw_conv_relu_stats(a_img, scale, shift, dw_w, dw_b, *, k):
    if k % 2 == 0:
        # TODO(synk): PyTorch 'same' padding for even k is asymmetric.
        raise NotImplementedError("even kernel_size not supported")
    n, hp, wp, d = a_img.shape
    return pl.pallas_call(
        functools.partial(dw_kernel, k=k, hp=hp, wp=wp),
        out_shape=(jax.ShapeDtypeStruct((n, hp, wp, d), jnp.bfloat16),
                   jax.ShapeDtypeStruct((n, 2, d), jnp.float32)),
        grid=(n,),
        in_specs=[
            pl.BlockSpec((1, hp, wp, d), lambda b: (b, 0, 0, 0)),
            _vec1(d), _vec1(d),
            pl.BlockSpec((k * k, d), lambda b: (0, 0)),
            _vec1(d),
        ],
        out_specs=(
            pl.BlockSpec((1, hp, wp, d), lambda b: (b, 0, 0, 0)),
            pl.BlockSpec((1, 2, d), lambda b: (b, 0, 0)),
        ),
        compiler_params=pltpu.CompilerParams(
            dimension_semantics=("parallel",),
            vmem_limit_bytes=VMEM_LIMIT),
    )(a_img, scale, shift, dw_w, dw_b)


# ---------------------------------------------------------------------------
# Kernel 4 (head): batch+HW tiled global average pool (resident accumulator
#   over HW) with fused final BN-apply, then Linear into a 128-padded,
#   lane-dense logits block.
# ---------------------------------------------------------------------------
def head_kernel(a_ref, sc_ref, sh_ref, w_ref, b_ref, o_ref, acc_ref, *, inv_hw):
    @pl.when(pl.program_id(1) == 0)
    def _():
        acc_ref[...] = jnp.zeros_like(acc_ref)

    acc_ref[...] += jnp.sum(a_ref[...].astype(jnp.float32), axis=1)

    @pl.when(pl.program_id(1) == pl.num_programs(1) - 1)
    def _():
        pooled = acc_ref[...] * inv_hw * sc_ref[...] + sh_ref[...]
        o_ref[...] = (jnp.dot(pooled.astype(jnp.bfloat16), w_ref[...],
                              preferred_element_type=jnp.float32)
                      + b_ref[...])


def head_pool_linear(a, scale, shift, w, b):
    n, hw, d = a.shape
    ncp = w.shape[1]
    tn = _batch_tile(n)
    thw = _pick_tile(hw)
    gb, ghw = n // tn, hw // thw
    return pl.pallas_call(
        functools.partial(head_kernel, inv_hw=1.0 / hw),
        out_shape=jax.ShapeDtypeStruct((n, ncp), jnp.float32),
        grid=(gb, ghw),
        in_specs=[
            pl.BlockSpec((tn, thw, d), lambda i, j: (i, j, 0)),
            _vec2(d), _vec2(d),
            pl.BlockSpec((d, ncp), lambda i, j: (0, 0)),
            pl.BlockSpec((1, ncp), lambda i, j: (0, 0)),
        ],
        out_specs=pl.BlockSpec((tn, ncp), lambda i, j: (i, 0)),
        scratch_shapes=[pltpu.VMEM((tn, d), jnp.float32)],
        compiler_params=pltpu.CompilerParams(
            dimension_semantics=("parallel", "arbitrary"),
            vmem_limit_bytes=VMEM_LIMIT),
    )(a, scale, shift, w, b)


# ---------------------------------------------------------------------------
# Tiny XLA epilogue: combine per-tile BN stat partials into (scale, shift).
# ---------------------------------------------------------------------------
def bn_scale_shift(stats, count, gamma, beta):
    s = jnp.sum(stats[:, 0, :], axis=0)
    ss = jnp.sum(stats[:, 1, :], axis=0)
    mean = s / count
    # E[x^2] - mean^2 in f32 (clamped); adequate for post-ReLU activations.
    var = jnp.maximum(ss / count - mean * mean, 0.0)
    inv = jax.lax.rsqrt(var + BN_EPS)
    scale = gamma.reshape(-1) * inv
    shift = beta.reshape(-1) - mean * scale
    return scale.reshape(1, -1), shift.reshape(1, -1)


# ---------------------------------------------------------------------------
# Full forward (glue in plain JAX; hot paths in the Pallas kernels above).
# ---------------------------------------------------------------------------
def convmixer_forward(x_nchw, params):
    p = params["patch_size"]
    k = params["kernel_size"]
    dp = params["dim_p"]

    # Cast to bf16 BEFORE im2col so the reshape/transpose moves half the bytes.
    x = jnp.transpose(x_nchw, (0, 2, 3, 1)).astype(jnp.bfloat16)  # NHWC bf16
    n, h, w, cin = x.shape
    hp, wp = h // p, w // p
    m = n * hp * wp

    # Patch embedding: strided conv == per-patch matmul; pad K to 128-multiple.
    k0 = p * p * cin
    kp = params["stem_w"].shape[0]
    patches = (x.reshape(n, hp, p, wp, p, cin)
                .transpose(0, 1, 3, 2, 4, 5)
                .reshape(m, k0))
    if kp > k0:
        patches = jnp.pad(patches, ((0, 0), (0, kp - k0)))

    a, stats = matmul_relu_stats(patches, params["stem_w"], params["stem_b"])
    scale, shift = bn_scale_shift(stats, m, params["stem_gamma"],
                                  params["stem_beta"])

    for blk in params["blocks"]:
        a_img = a.reshape(n, hp, wp, dp)
        t, tstats = dw_conv_relu_stats(a_img, scale, shift,
                                       blk["dw_w"], blk["dw_b"], k=k)
        dsc, dsh = bn_scale_shift(tstats, m, blk["dw_gamma"], blk["dw_beta"])
        a, ystats = pw_block(t.reshape(m, dp), a, dsc, dsh, scale, shift,
                             blk["pw_w"], blk["pw_b"])
        scale, shift = bn_scale_shift(ystats, m, blk["pw_gamma"],
                                      blk["pw_beta"])

    logits = head_pool_linear(a.reshape(n, hp * wp, dp), scale, shift,
                              params["head_w"], params["head_b"])
    return logits[:, :params["n_classes"]]


# ---------------------------------------------------------------------------
# Deterministic synthetic parameter init (shapes match the nn.Module, padded
# to lane-dense channel / class counts with exact zeros).
# ---------------------------------------------------------------------------
def init_params(key, *, dim, depth, kernel_size, patch_size, n_classes, in_ch=3):
    dp = _round_up(dim, 128)
    ncp = _round_up(n_classes, 128)
    k0 = patch_size * patch_size * in_ch
    kp = _round_up(k0, 128)
    keys = iter(jax.random.split(key, 6 + 8 * depth))

    def nrm(shape, s=0.1):
        return s * jax.random.normal(next(keys), shape, dtype=jnp.float32)

    def pad_to(a, shape):
        return jnp.pad(a, [(0, t - s) for s, t in zip(a.shape, shape)])

    params = {
        "dim": dim, "dim_p": dp, "n_classes": n_classes,
        "kernel_size": kernel_size, "patch_size": patch_size,
        "stem_w": pad_to(nrm((k0, dim)), (kp, dp)).astype(jnp.bfloat16),
        "stem_b": pad_to(nrm((1, dim)), (1, dp)),
        "stem_gamma": pad_to(1.0 + nrm((1, dim), 0.05), (1, dp)),
        "stem_beta": pad_to(nrm((1, dim), 0.05), (1, dp)),
        "head_w": pad_to(nrm((dim, n_classes)), (dp, ncp)).astype(jnp.bfloat16),
        "head_b": pad_to(nrm((1, n_classes)), (1, ncp)),
        "blocks": [],
    }
    kk = kernel_size * kernel_size
    for _ in range(depth):
        params["blocks"].append({
            "dw_w": pad_to(nrm((kk, dim)), (kk, dp)),
            "dw_b": pad_to(nrm((1, dim)), (1, dp)),
            "dw_gamma": pad_to(1.0 + nrm((1, dim), 0.05), (1, dp)),
            "dw_beta": pad_to(nrm((1, dim), 0.05), (1, dp)),
            "pw_w": pad_to(nrm((dim, dim)), (dp, dp)).astype(jnp.bfloat16),
            "pw_b": pad_to(nrm((1, dim)), (1, dp)),
            "pw_gamma": pad_to(1.0 + nrm((1, dim), 0.05), (1, dp)),
            "pw_beta": pad_to(nrm((1, dim), 0.05), (1, dp)),
        })
    return params


if __name__ == "__main__":
    # Small shapes consistent with ConvMixer(dim, depth, kernel_size, patch_size, n_classes)
    N, Cin, H, W = 2, 3, 16, 16
    dim, depth, kernel_size, patch_size, n_classes = 32, 2, 3, 2, 10

    root = jax.random.PRNGKey(0)
    k_params, k_x = jax.random.split(root)
    params = init_params(k_params, dim=dim, depth=depth,
                         kernel_size=kernel_size, patch_size=patch_size,
                         n_classes=n_classes)
    x = jax.random.normal(k_x, (N, Cin, H, W), dtype=jnp.float32)

    fwd = jax.jit(functools.partial(convmixer_forward, params=params))
    logits = fwd(x)
    jax.block_until_ready(logits)
    assert logits.shape == (N, n_classes), logits.shape
    assert bool(jnp.all(jnp.isfinite(logits)))
    print("KERNEL_OK")
</pallas_src>

<mosaic_0001>
module attributes {stable_mosaic.version = 11 : i64} {
  func.func @matmul_relu_stats_kernel(%arg0: i32, %arg1: memref<128x128xbf16, #tpu.memory_space<vmem>>, %arg2: memref<128x128xbf16, #tpu.memory_space<vmem>>, %arg3: memref<1x128xf32, #tpu.memory_space<vmem>>, %arg4: memref<128x128xbf16, #tpu.memory_space<vmem>>, %arg5: memref<1x2x128xf32, #tpu.memory_space<vmem>>) attributes {dimension_semantics = [#tpu.dimension_semantics<parallel>], iteration_bounds = array<i64: 1>, scalar_prefetch = 0 : i64, scratch_operands = 0 : i64, tpu.core_type = #tpu.core_type<tc>, window_params = [{transform_indices = @transform_0, window_bounds = array<i64: 128, 128>}, {pipeline_mode = #tpu.pipeline_mode<synchronous>, transform_indices = @transform_1, window_bounds = array<i64: 128, 128>}, {pipeline_mode = #tpu.pipeline_mode<synchronous>, transform_indices = @transform_2, window_bounds = array<i64: 1, 128>}, {transform_indices = @transform_3, window_bounds = array<i64: 128, 128>}, {transform_indices = @transform_4, window_bounds = array<i64: 1, 2, 128>}]} {
    %c0 = arith.constant 0 : index
    %c0_0 = arith.constant 0 : index
    %0 = vector.load %arg1[%c0, %c0_0] : memref<128x128xbf16, #tpu.memory_space<vmem>>, vector<128x128xbf16>
    %c0_1 = arith.constant 0 : index
    %c0_2 = arith.constant 0 : index
    %1 = vector.load %arg2[%c0_1, %c0_2] : memref<128x128xbf16, #tpu.memory_space<vmem>>, vector<128x128xbf16>
    %cst = arith.constant dense<0.000000e+00> : vector<128x128xf32>
    %2 = tpu.matmul %0, %1, %cst {dimension_numbers = #tpu.dot_dimension_numbers<[1], [0], [0], [1], [0, 0, 1, 1], [], []>} : vector<128x128xbf16>, vector<128x128xbf16>, vector<128x128xf32> -> vector<128x128xf32>
    %c0_3 = arith.constant 0 : index
    %c0_4 = arith.constant 0 : index
    %3 = vector.load %arg3[%c0_3, %c0_4] : memref<1x128xf32, #tpu.memory_space<vmem>>, vector<1x128xf32>
    %4 = vector.broadcast %3 : vector<1x128xf32> to vector<128x128xf32>
    %5 = arith.addf %2, %4 : vector<128x128xf32>
    %cst_5 = arith.constant 0.000000e+00 : f32
    %6 = vector.broadcast %cst_5 : f32 to vector<128x128xf32>
    %7 = arith.maximumf %5, %6 : vector<128x128xf32>
    %8 = arith.truncf %7 : vector<128x128xf32> to vector<128x128xbf16>
    %c0_6 = arith.constant 0 : index
    %c0_7 = arith.constant 0 : index
    %9 = vector.load %arg4[%c0_6, %c0_7] : memref<128x128xbf16, #tpu.memory_space<vmem>>, vector<128x128xbf16>
    tpu.vector_store %arg4[%c0_6, %c0_7], %8 {strides = array<i32>} : memref<128x128xbf16, #tpu.memory_space<vmem>>, vector<128x128xbf16>,
    %cst_8 = arith.constant dense<0.000000e+00> : vector<128xf32>
    %10 = vector.multi_reduction <add>, %7, %cst_8 [0] : vector<128x128xf32> to vector<128xf32>
    %11 = vector.shape_cast %10 : vector<128xf32> to vector<1x128xf32>
    %12 = arith.mulf %7, %7 : vector<128x128xf32>
    %cst_9 = arith.constant dense<0.000000e+00> : vector<128xf32>
    %13 = vector.multi_reduction <add>, %12, %cst_9 [0] : vector<128x128xf32> to vector<128xf32>
    %14 = vector.shape_cast %13 : vector<128xf32> to vector<1x128xf32>
    %15 = tpu.concatenate %11, %14 in 0 : vector<1x128xf32>, vector<1x128xf32> -> vector<2x128xf32>
    %16 = vector.shape_cast %15 : vector<2x128xf32> to vector<1x2x128xf32>
    %c0_10 = arith.constant 0 : index
    %c0_11 = arith.constant 0 : index
    %c0_12 = arith.constant 0 : index
    %17 = vector.load %arg5[%c0_10, %c0_11, %c0_12] : memref<1x2x128xf32, #tpu.memory_space<vmem>>, vector<1x2x128xf32>
    tpu.vector_store %arg5[%c0_10, %c0_11, %c0_12], %16 {strides = array<i32>} : memref<1x2x128xf32, #tpu.memory_space<vmem>>, vector<1x2x128xf32>,
    return
  }
  func.func @transform_0(%arg0: i32) -> (i32, i32) {
    %c0_i32 = arith.constant 0 : i32
    %c0_i32_0 = arith.constant 0 : i32
    return %arg0, %c0_i32 : i32, i32
  }
  func.func @transform_1(%arg0: i32) -> (i32, i32) {
    %c0_i32 = arith.constant 0 : i32
    %c0_i32_0 = arith.constant 0 : i32
    %c0_i32_1 = arith.constant 0 : i32
    return %c0_i32, %c0_i32_0 : i32, i32
  }
  func.func @transform_2(%arg0: i32) -> (i32, i32) {
    %c0_i32 = arith.constant 0 : i32
    %c0_i32_0 = arith.constant 0 : i32
    %c0_i32_1 = arith.constant 0 : i32
    return %c0_i32, %c0_i32_0 : i32, i32
  }
  func.func @transform_3(%arg0: i32) -> (i32, i32) {
    %c0_i32 = arith.constant 0 : i32
    %c0_i32_0 = arith.constant 0 : i32
    return %arg0, %c0_i32 : i32, i32
  }
  func.func @transform_4(%arg0: i32) -> (i32, i32, i32) {
    %c0_i32 = arith.constant 0 : i32
    %c0_i32_0 = arith.constant 0 : i32
    %c0_i32_1 = arith.constant 0 : i32
    return %arg0, %c0_i32, %c0_i32_0 : i32, i32, i32
  }
}

module attributes {stable_mosaic.version = 11 : i64} {
  func.func @pw_block_kernel(%arg0: i32, %arg1: memref<128x128xbf16, #tpu.memory_space<vmem>>, %arg2: memref<128x128xbf16, #tpu.memory_space<vmem>>, %arg3: memref<1x128xf32, #tpu.memory_space<vmem>>, %arg4: memref<1x128xf32, #tpu.memory_space<vmem>>, %arg5: memref<1x128xf32, #tpu.memory_space<vmem>>, %arg6: memref<1x128xf32, #tpu.memory_space<vmem>>, %arg7: memref<128x128xbf16, #tpu.memory_space<vmem>>, %arg8: memref<1x128xf32, #tpu.memory_space<vmem>>, %arg9: memref<128x128xbf16, #tpu.memory_space<vmem>>, %arg10: memref<1x2x128xf32, #tpu.memory_space<vmem>>) attributes {dimension_semantics = [#tpu.dimension_semantics<parallel>], iteration_bounds = array<i64: 1>, scalar_prefetch = 0 : i64, scratch_operands = 0 : i64, tpu.core_type = #tpu.core_type<tc>, window_params = [{transform_indices = @transform_0, window_bounds = array<i64: 128, 128>}, {transform_indices = @transform_1, window_bounds = array<i64: 128, 128>}, {pipeline_mode = #tpu.pipeline_mode<synchronous>, transform_indices = @transform_2, window_bounds = array<i64: 1, 128>}, {pipeline_mode = #tpu.pipeline_mode<synchronous>, transform_indices = @transform_3, window_bounds = array<i64: 1, 128>}, {pipeline_mode = #tpu.pipeline_mode<synchronous>, transform_indices = @transform_4, window_bounds = array<i64: 1, 128>}, {pipeline_mode = #tpu.pipeline_mode<synchronous>, transform_indices = @transform_5, window_bounds = array<i64: 1, 128>}, {pipeline_mode = #tpu.pipeline_mode<synchronous>, transform_indices = @transform_6, window_bounds = array<i64: 128, 128>}, {pipeline_mode = #tpu.pipeline_mode<synchronous>, transform_indices = @transform_7, window_bounds = array<i64: 1, 128>}, {transform_indices = @transform_8, window_bounds = array<i64: 128, 128>}, {transform_indices = @transform_9, window_bounds = array<i64: 1, 2, 128>}]} {
    %c0 = arith.constant 0 : index
    %c0_0 = arith.constant 0 : index
    %0 = vector.load %arg1[%c0, %c0_0] : memref<128x128xbf16, #tpu.memory_space<vmem>>, vector<128x128xbf16>
    %1 = arith.extf %0 : vector<128x128xbf16> to vector<128x128xf32>
    %c0_1 = arith.constant 0 : index
    %c0_2 = arith.constant 0 : index
    %2 = vector.load %arg3[%c0_1, %c0_2] : memref<1x128xf32, #tpu.memory_space<vmem>>, vector<1x128xf32>
    %3 = vector.broadcast %2 : vector<1x128xf32> to vector<128x128xf32>
    %4 = arith.mulf %1, %3 : vector<128x128xf32>
    %c0_3 = arith.constant 0 : index
    %c0_4 = arith.constant 0 : index
    %5 = vector.load %arg4[%c0_3, %c0_4] : memref<1x128xf32, #tpu.memory_space<vmem>>, vector<1x128xf32>
    %6 = vector.broadcast %5 : vector<1x128xf32> to vector<128x128xf32>
    %7 = arith.addf %4, %6 : vector<128x128xf32>
    %c0_5 = arith.constant 0 : index
    %c0_6 = arith.constant 0 : index
    %8 = vector.load %arg2[%c0_5, %c0_6] : memref<128x128xbf16, #tpu.memory_space<vmem>>, vector<128x128xbf16>
    %9 = arith.extf %8 : vector<128x128xbf16> to vector<128x128xf32>
    %c0_7 = arith.constant 0 : index
    %c0_8 = arith.constant 0 : index
    %10 = vector.load %arg5[%c0_7, %c0_8] : memref<1x128xf32, #tpu.memory_space<vmem>>, vector<1x128xf32>
    %11 = vector.broadcast %10 : vector<1x128xf32> to vector<128x128xf32>
    %12 = arith.mulf %9, %11 : vector<128x128xf32>
    %13 = arith.addf %7, %12 : vector<128x128xf32>
    %c0_9 = arith.constant 0 : index
    %c0_10 = arith.constant 0 : index
    %14 = vector.load %arg6[%c0_9, %c0_10] : memref<1x128xf32, #tpu.memory_space<vmem>>, vector<1x128xf32>
    %15 = vector.broadcast %14 : vector<1x128xf32> to vector<128x128xf32>
    %16 = arith.addf %13, %15 : vector<128x128xf32>
    %17 = arith.truncf %16 : vector<128x128xf32> to vector<128x128xbf16>
    %c0_11 = arith.constant 0 : index
    %c0_12 = arith.constant 0 : index
    %18 = vector.load %arg7[%c0_11, %c0_12] : memref<128x128xbf16, #tpu.memory_space<vmem>>, vector<128x128xbf16>
    %cst = arith.constant dense<0.000000e+00> : vector<128x128xf32>
    %19 = tpu.matmul %17, %18, %cst {dimension_numbers = #tpu.dot_dimension_numbers<[1], [0], [0], [1], [0, 0, 1, 1], [], []>} : vector<128x128xbf16>, vector<128x128xbf16>, vector<128x128xf32> -> vector<128x128xf32>
    %c0_13 = arith.constant 0 : index
    %c0_14 = arith.constant 0 : index
    %20 = vector.load %arg8[%c0_13, %c0_14] : memref<1x128xf32, #tpu.memory_space<vmem>>, vector<1x128xf32>
    %21 = vector.broadcast %20 : vector<1x128xf32> to vector<128x128xf32>
    %22 = arith.addf %19, %21 : vector<128x128xf32>
    %cst_15 = arith.constant 0.000000e+00 : f32
    %23 = vector.broadcast %cst_15 : f32 to vector<128x128xf32>
    %24 = arith.maximumf %22, %23 : vector<128x128xf32>
    %25 = arith.truncf %24 : vector<128x128xf32> to vector<128x128xbf16>
    %c0_16 = arith.constant 0 : index
    %c0_17 = arith.constant 0 : index
    %26 = vector.load %arg9[%c0_16, %c0_17] : memref<128x128xbf16, #tpu.memory_space<vmem>>, vector<128x128xbf16>
    tpu.vector_store %arg9[%c0_16, %c0_17], %25 {strides = array<i32>} : memref<128x128xbf16, #tpu.memory_space<vmem>>, vector<128x128xbf16>,
    %cst_18 = arith.constant dense<0.000000e+00> : vector<128xf32>
    %27 = vector.multi_reduction <add>, %24, %cst_18 [0] : vector<128x128xf32> to vector<128xf32>
    %28 = vector.shape_cast %27 : vector<128xf32> to vector<1x128xf32>
    %29 = arith.mulf %24, %24 : vector<128x128xf32>
    %cst_19 = arith.constant dense<0.000000e+00> : vector<128xf32>
    %30 = vector.multi_reduction <add>, %29, %cst_19 [0] : vector<128x128xf32> to vector<128xf32>
    %31 = vector.shape_cast %30 : vector<128xf32> to vector<1x128xf32>
    %32 = tpu.concatenate %28, %31 in 0 : vector<1x128xf32>, vector<1x128xf32> -> vector<2x128xf32>
    %33 = vector.shape_cast %32 : vector<2x128xf32> to vector<1x2x128xf32>
    %c0_20 = arith.constant 0 : index
    %c0_21 = arith.constant 0 : index
    %c0_22 = arith.constant 0 : index
    %34 = vector.load %arg10[%c0_20, %c0_21, %c0_22] : memref<1x2x128xf32, #tpu.memory_space<vmem>>, vector<1x2x128xf32>
    tpu.vector_store %arg10[%c0_20, %c0_21, %c0_22], %33 {strides = array<i32>} : memref<1x2x128xf32, #tpu.memory_space<vmem>>, vector<1x2x128xf32>,
    return
  }
  func.func @transform_0(%arg0: i32) -> (i32, i32) {
    %c0_i32 = arith.constant 0 : i32
    %c0_i32_0 = arith.constant 0 : i32
    return %arg0, %c0_i32 : i32, i32
  }
  func.func @transform_1(%arg0: i32) -> (i32, i32) {
    %c0_i32 = arith.constant 0 : i32
    %c0_i32_0 = arith.constant 0 : i32
    return %arg0, %c0_i32 : i32, i32
  }
  func.func @transform_2(%arg0: i32) -> (i32, i32) {
    %c0_i32 = arith.constant 0 : i32
    %c0_i32_0 = arith.constant 0 : i32
    %c0_i32_1 = arith.constant 0 : i32
    return %c0_i32, %c0_i32_0 : i32, i32
  }
  func.func @transform_3(%arg0: i32) -> (i32, i32) {
    %c0_i32 = arith.constant 0 : i32
    %c0_i32_0 = arith.constant 0 : i32
    %c0_i32_1 = arith.constant 0 : i32
    return %c0_i32, %c0_i32_0 : i32, i32
  }
  func.func @transform_4(%arg0: i32) -> (i32, i32) {
    %c0_i32 = arith.constant 0 : i32
    %c0_i32_0 = arith.constant 0 : i32
    %c0_i32_1 = arith.constant 0 : i32
    return %c0_i32, %c0_i32_0 : i32, i32
  }
  func.func @transform_5(%arg0: i32) -> (i32, i32) {
    %c0_i32 = arith.constant 0 : i32
    %c0_i32_0 = arith.constant 0 : i32
    %c0_i32_1 = arith.constant 0 : i32
    return %c0_i32, %c0_i32_0 : i32, i32
  }
  func.func @transform_6(%arg0: i32) -> (i32, i32) {
    %c0_i32 = arith.constant 0 : i32
    %c0_i32_0 = arith.constant 0 : i32
    %c0_i32_1 = arith.constant 0 : i32
    return %c0_i32, %c0_i32_0 : i32, i32
  }
  func.func @transform_7(%arg0: i32) -> (i32, i32) {
    %c0_i32 = arith.constant 0 : i32
    %c0_i32_0 = arith.constant 0 : i32
    %c0_i32_1 = arith.constant 0 : i32
    return %c0_i32, %c0_i32_0 : i32, i32
  }
  func.func @transform_8(%arg0: i32) -> (i32, i32) {
    %c0_i32 = arith.constant 0 : i32
    %c0_i32_0 = arith.constant 0 : i32
    return %arg0, %c0_i32 : i32, i32
  }
  func.func @transform_9(%arg0: i32) -> (i32, i32, i32) {
    %c0_i32 = arith.constant 0 : i32
    %c0_i32_0 = arith.constant 0 : i32
    %c0_i32_1 = arith.constant 0 : i32
    return %arg0, %c0_i32, %c0_i32_0 : i32, i32, i32
  }
}

module attributes {stable_mosaic.version = 11 : i64} {
  func.func @dw_kernel(%arg0: i32, %arg1: memref<1x8x8x128xbf16, #tpu.memory_space<vmem>>, %arg2: memref<1x128xf32, #tpu.memory_space<vmem>>, %arg3: memref<1x128xf32, #tpu.memory_space<vmem>>, %arg4: memref<9x128xf32, #tpu.memory_space<vmem>>, %arg5: memref<1x128xf32, #tpu.memory_space<vmem>>, %arg6: memref<1x8x8x128xbf16, #tpu.memory_space<vmem>>, %arg7: memref<1x2x128xf32, #tpu.memory_space<vmem>>) attributes {dimension_semantics = [#tpu.dimension_semantics<parallel>], iteration_bounds = array<i64: 2>, scalar_prefetch = 0 : i64, scratch_operands = 0 : i64, tpu.core_type = #tpu.core_type<tc>, window_params = [{transform_indices = @transform_0, window_bounds = array<i64: 1, 8, 8, 128>}, {pipeline_mode = #tpu.pipeline_mode<synchronous>, transform_indices = @transform_1, window_bounds = array<i64: 1, 128>}, {pipeline_mode = #tpu.pipeline_mode<synchronous>, transform_indices = @transform_2, window_bounds = array<i64: 1, 128>}, {pipeline_mode = #tpu.pipeline_mode<synchronous>, transform_indices = @transform_3, window_bounds = array<i64: 9, 128>}, {pipeline_mode = #tpu.pipeline_mode<synchronous>, transform_indices = @transform_4, window_bounds = array<i64: 1, 128>}, {transform_indices = @transform_5, window_bounds = array<i64: 1, 8, 8, 128>}, {transform_indices = @transform_6, window_bounds = array<i64: 1, 2, 128>}]} {
    %c0 = arith.constant 0 : index
    %c0_0 = arith.constant 0 : index
    %c0_1 = arith.constant 0 : index
    %c0_2 = arith.constant 0 : index
    %0 = vector.load %arg1[%c0, %c0_0, %c0_1, %c0_2] : memref<1x8x8x128xbf16, #tpu.memory_space<vmem>>, vector<1x8x8x128xbf16>
    %1 = arith.extf %0 : vector<1x8x8x128xbf16> to vector<1x8x8x128xf32>
    %2 = vector.shape_cast %1 : vector<1x8x8x128xf32> to vector<64x128xf32>
    %c0_3 = arith.constant 0 : index
    %c0_4 = arith.constant 0 : index
    %3 = vector.load %arg2[%c0_3, %c0_4] : memref<1x128xf32, #tpu.memory_space<vmem>>, vector<1x128xf32>
    %4 = vector.broadcast %3 : vector<1x128xf32> to vector<64x128xf32>
    %5 = arith.mulf %2, %4 : vector<64x128xf32>
    %c0_5 = arith.constant 0 : index
    %c0_6 = arith.constant 0 : index
    %6 = vector.load %arg3[%c0_5, %c0_6] : memref<1x128xf32, #tpu.memory_space<vmem>>, vector<1x128xf32>
    %7 = vector.broadcast %6 : vector<1x128xf32> to vector<64x128xf32>
    %8 = arith.addf %5, %7 : vector<64x128xf32>
    %cst = arith.constant 0.000000e+00 : f32
    %9 = vector.broadcast %cst : f32 to vector<8x128xf32>
    %10 = tpu.concatenate %9, %8, %9 in 0 : vector<8x128xf32>, vector<64x128xf32>, vector<8x128xf32> -> vector<80x128xf32>
    %c0_7 = arith.constant 0 : index
    %c0_8 = arith.constant 0 : index
    %11 = vector.load %arg4[%c0_7, %c0_8] : memref<9x128xf32, #tpu.memory_space<vmem>>, vector<9x128xf32>
    %c0_9 = arith.constant 0 : index
    %c0_10 = arith.constant 0 : index
    %12 = vector.load %arg5[%c0_9, %c0_10] : memref<1x128xf32, #tpu.memory_space<vmem>>, vector<1x128xf32>
    %13 = tpu.iota {dimensions = array<i32: 0>} : vector<80x1xi32>
    %c8_i32 = arith.constant 8 : i32
    %c0_i32 = arith.constant 0 : i32
    %14 = arith.cmpi eq, %c8_i32, %c0_i32 : i32
    %c1_i32 = arith.constant 1 : i32
    %15 = arith.select %14, %c1_i32, %c8_i32 : i32
    %16 = vector.broadcast %15 : i32 to vector<80x1xi32>
    %17 = arith.remsi %13, %16 : vector<80x1xi32>
    %c0_i32_11 = arith.constant 0 : i32
    %18 = vector.broadcast %c0_i32_11 : i32 to vector<80x1xi32>
    %19 = arith.cmpi ne, %17, %18 : vector<80x1xi32>
    %c0_i32_12 = arith.constant 0 : i32
    %20 = vector.broadcast %c0_i32_12 : i32 to vector<80x1xi32>
    %21 = arith.cmpi slt, %17, %20 : vector<80x1xi32>
    %c0_i32_13 = arith.constant 0 : i32
    %22 = arith.cmpi slt, %15, %c0_i32_13 : i32
    %23 = vector.broadcast %22 : i1 to vector<80x1xi1>
    %24 = vector.broadcast %23 : vector<80x1xi1> to vector<80x1xi1>
    %25 = arith.xori %21, %24 : vector<80x1xi1>
    %26 = arith.andi %25, %19 : vector<80x1xi1>
    %27 = vector.broadcast %15 : i32 to vector<80x1xi32>
    %28 = arith.addi %17, %27 : vector<80x1xi32>
    %29 = arith.select %26, %28, %17 : vector<80x1xi1>, vector<80x1xi32>
    %cst_14 = arith.constant 0.000000e+00 : f32
    %30 = vector.broadcast %cst_14 : f32 to vector<64x128xf32>
    %c1_i32_15 = arith.constant 1 : i32
    %31 = tpu.dynamic_rotate %10 by %c1_i32_15 dim 0 : vector<80x128xf32>, i32 -> vector<80x128xf32>
    %c-1_i32 = arith.constant -1 : i32
    %32 = vector.broadcast %c-1_i32 : i32 to vector<80x1xi32>
    %33 = arith.addi %29, %32 : vector<80x1xi32>
    %c0_i32_16 = arith.constant 0 : i32
    %34 = vector.broadcast %c0_i32_16 : i32 to vector<80x1xi32>
    %35 = arith.cmpi sge, %33, %34 : vector<80x1xi32>
    %c-1_i32_17 = arith.constant -1 : i32
    %36 = vector.broadcast %c-1_i32_17 : i32 to vector<80x1xi32>
    %37 = arith.addi %29, %36 : vector<80x1xi32>
    %c8_i32_18 = arith.constant 8 : i32
    %38 = vector.broadcast %c8_i32_18 : i32 to vector<80x1xi32>
    %39 = arith.cmpi slt, %37, %38 : vector<80x1xi32>
    %40 = arith.andi %35, %39 : vector<80x1xi1>
    %cst_19 = arith.constant 0.000000e+00 : f32
    %41 = vector.shape_cast %40 : vector<80x1xi1> to vector<80x1xi1>
    %42 = vector.broadcast %41 : vector<80x1xi1> to vector<80x128xi1>
    %43 = vector.broadcast %cst_19 : f32 to vector<80x128xf32>
    %44 = arith.select %42, %31, %43 : vector<80x128xi1>, vector<80x128xf32>
    %45 = vector.extract_strided_slice %44 {offsets = [0, 0], sizes = [64, 128], strides = [1, 1]} : vector<80x128xf32> to vector<64x128xf32>
    %46 = vector.extract_strided_slice %11 {offsets = [0, 0], sizes = [1, 128], strides = [1, 1]} : vector<9x128xf32> to vector<1x128xf32>
    %47 = vector.broadcast %46 : vector<1x128xf32> to vector<64x128xf32>
    %48 = arith.mulf %45, %47 : vector<64x128xf32>
    %49 = arith.addf %30, %48 : vector<64x128xf32>
    %50 = vector.extract_strided_slice %44 {offsets = [8, 0], sizes = [64, 128], strides = [1, 1]} : vector<80x128xf32> to vector<64x128xf32>
    %51 = vector.extract_strided_slice %11 {offsets = [3, 0], sizes = [1, 128], strides = [1, 1]} : vector<9x128xf32> to vector<1x128xf32>
    %52 = vector.broadcast %51 : vector<1x128xf32> to vector<64x128xf32>
    %53 = arith.mulf %50, %52 : vector<64x128xf32>
    %54 = arith.addf %49, %53 : vector<64x128xf32>
    %55 = vector.extract_strided_slice %44 {offsets = [16, 0], sizes = [64, 128], strides = [1, 1]} : vector<80x128xf32> to vector<64x128xf32>
    %56 = vector.extract_strided_slice %11 {offsets = [6, 0], sizes = [1, 128], strides = [1, 1]} : vector<9x128xf32> to vector<1x128xf32>
    %57 = vector.broadcast %56 : vector<1x128xf32> to vector<64x128xf32>
    %58 = arith.mulf %55, %57 : vector<64x128xf32>
    %59 = arith.addf %54, %58 : vector<64x128xf32>
    %60 = vector.extract_strided_slice %10 {offsets = [0, 0], sizes = [64, 128], strides = [1, 1]} : vector<80x128xf32> to vector<64x128xf32>
    %61 = vector.extract_strided_slice %11 {offsets = [1, 0], sizes = [1, 128], strides = [1, 1]} : vector<9x128xf32> to vector<1x128xf32>
    %62 = vector.broadcast %61 : vector<1x128xf32> to vector<64x128xf32>
    %63 = arith.mulf %60, %62 : vector<64x128xf32>
    %64 = arith.addf %59, %63 : vector<64x128xf32>
    %65 = vector.extract_strided_slice %10 {offsets = [8, 0], sizes = [64, 128], strides = [1, 1]} : vector<80x128xf32> to vector<64x128xf32>
    %66 = vector.extract_strided_slice %11 {offsets = [4, 0], sizes = [1, 128], strides = [1, 1]} : vector<9x128xf32> to vector<1x128xf32>
    %67 = vector.broadcast %66 : vector<1x128xf32> to vector<64x128xf32>
    %68 = arith.mulf %65, %67 : vector<64x128xf32>
    %69 = arith.addf %64, %68 : vector<64x128xf32>
    %70 = vector.extract_strided_slice %10 {offsets = [16, 0], sizes = [64, 128], strides = [1, 1]} : vector<80x128xf32> to vector<64x128xf32>
    %71 = vector.extract_strided_slice %11 {offsets = [7, 0], sizes = [1, 128], strides = [1, 1]} : vector<9x128xf32> to vector<1x128xf32>
    %72 = vector.broadcast %71 : vector<1x128xf32> to vector<64x128xf32>
    %73 = arith.mulf %70, %72 : vector<64x128xf32>
    %74 = arith.addf %69, %73 : vector<64x128xf32>
    %c79_i32 = arith.constant 79 : i32
    %75 = tpu.dynamic_rotate %10 by %c79_i32 dim 0 : vector<80x128xf32>, i32 -> vector<80x128xf32>
    %c1_i32_20 = arith.constant 1 : i32
    %76 = vector.broadcast %c1_i32_20 : i32 to vector<80x1xi32>
    %77 = arith.addi %29, %76 : vector<80x1xi32>
    %c0_i32_21 = arith.constant 0 : i32
    %78 = vector.broadcast %c0_i32_21 : i32 to vector<80x1xi32>
    %79 = arith.cmpi sge, %77, %78 : vector<80x1xi32>
    %c1_i32_22 = arith.constant 1 : i32
    %80 = vector.broadcast %c1_i32_22 : i32 to vector<80x1xi32>
    %81 = arith.addi %29, %80 : vector<80x1xi32>
    %c8_i32_23 = arith.constant 8 : i32
    %82 = vector.broadcast %c8_i32_23 : i32 to vector<80x1xi32>
    %83 = arith.cmpi slt, %81, %82 : vector<80x1xi32>
    %84 = arith.andi %79, %83 : vector<80x1xi1>
    %cst_24 = arith.constant 0.000000e+00 : f32
    %85 = vector.shape_cast %84 : vector<80x1xi1> to vector<80x1xi1>
    %86 = vector.broadcast %85 : vector<80x1xi1> to vector<80x128xi1>
    %87 = vector.broadcast %cst_24 : f32 to vector<80x128xf32>
    %88 = arith.select %86, %75, %87 : vector<80x128xi1>, vector<80x128xf32>
    %89 = vector.extract_strided_slice %88 {offsets = [0, 0], sizes = [64, 128], strides = [1, 1]} : vector<80x128xf32> to vector<64x128xf32>
    %90 = vector.extract_strided_slice %11 {offsets = [2, 0], sizes = [1, 128], strides = [1, 1]} : vector<9x128xf32> to vector<1x128xf32>
    %91 = vector.broadcast %90 : vector<1x128xf32> to vector<64x128xf32>
    %92 = arith.mulf %89, %91 : vector<64x128xf32>
    %93 = arith.addf %74, %92 : vector<64x128xf32>
    %94 = vector.extract_strided_slice %88 {offsets = [8, 0], sizes = [64, 128], strides = [1, 1]} : vector<80x128xf32> to vector<64x128xf32>
    %95 = vector.extract_strided_slice %11 {offsets = [5, 0], sizes = [1, 128], strides = [1, 1]} : vector<9x128xf32> to vector<1x128xf32>
    %96 = vector.broadcast %95 : vector<1x128xf32> to vector<64x128xf32>
    %97 = arith.mulf %94, %96 : vector<64x128xf32>
    %98 = arith.addf %93, %97 : vector<64x128xf32>
    %99 = vector.extract_strided_slice %88 {offsets = [16, 0], sizes = [64, 128], strides = [1, 1]} : vector<80x128xf32> to vector<64x128xf32>
    %100 = vector.extract_strided_slice %11 {offsets = [8, 0], sizes = [1, 128], strides = [1, 1]} : vector<9x128xf32> to vector<1x128xf32>
    %101 = vector.broadcast %100 : vector<1x128xf32> to vector<64x128xf32>
    %102 = arith.mulf %99, %101 : vector<64x128xf32>
    %103 = arith.addf %98, %102 : vector<64x128xf32>
    %104 = vector.broadcast %12 : vector<1x128xf32> to vector<64x128xf32>
    %105 = arith.addf %103, %104 : vector<64x128xf32>
    %cst_25 = arith.constant 0.000000e+00 : f32
    %106 = vector.broadcast %cst_25 : f32 to vector<64x128xf32>
    %107 = arith.maximumf %105, %106 : vector<64x128xf32>
    %108 = vector.shape_cast %107 : vector<64x128xf32> to vector<1x8x8x128xf32>
    %109 = arith.truncf %108 : vector<1x8x8x128xf32> to vector<1x8x8x128xbf16>
    %c0_26 = arith.constant 0 : index
    %c0_27 = arith.constant 0 : index
    %c0_28 = arith.constant 0 : index
    %c0_29 = arith.constant 0 : index
    %110 = vector.load %arg6[%c0_26, %c0_27, %c0_28, %c0_29] : memref<1x8x8x128xbf16, #tpu.memory_space<vmem>>, vector<1x8x8x128xbf16>
    tpu.vector_store %arg6[%c0_26, %c0_27, %c0_28, %c0_29], %109 {strides = array<i32>} : memref<1x8x8x128xbf16, #tpu.memory_space<vmem>>, vector<1x8x8x128xbf16>,
    %cst_30 = arith.constant 1.000000e+00 : f32
    %111 = vector.broadcast %cst_30 : f32 to vector<1x64xf32>
    %cst_31 = arith.constant dense<0.000000e+00> : vector<1x128xf32>
    %112 = tpu.matmul %111, %107, %cst_31 {dimension_numbers = #tpu.dot_dimension_numbers<[1], [0], [0], [1], [0, 0, 1, 1], [], []>} : vector<1x64xf32>, vector<64x128xf32>, vector<1x128xf32> -> vector<1x128xf32>
    %113 = arith.mulf %107, %107 : vector<64x128xf32>
    %cst_32 = arith.constant dense<0.000000e+00> : vector<1x128xf32>
    %114 = tpu.matmul %111, %113, %cst_32 {dimension_numbers = #tpu.dot_dimension_numbers<[1], [0], [0], [1], [0, 0, 1, 1], [], []>} : vector<1x64xf32>, vector<64x128xf32>, vector<1x128xf32> -> vector<1x128xf32>
    %115 = tpu.concatenate %112, %114 in 0 : vector<1x128xf32>, vector<1x128xf32> -> vector<2x128xf32>
    %116 = vector.shape_cast %115 : vector<2x128xf32> to vector<1x2x128xf32>
    %c0_33 = arith.constant 0 : index
    %c0_34 = arith.constant 0 : index
    %c0_35 = arith.constant 0 : index
    %117 = vector.load %arg7[%c0_33, %c0_34, %c0_35] : memref<1x2x128xf32, #tpu.memory_space<vmem>>, vector<1x2x128xf32>
    tpu.vector_store %arg7[%c0_33, %c0_34, %c0_35], %116 {strides = array<i32>} : memref<1x2x128xf32, #tpu.memory_space<vmem>>, vector<1x2x128xf32>,
    return
  }
  func.func @transform_0(%arg0: i32) -> (i32, i32, i32, i32) {
    %c0_i32 = arith.constant 0 : i32
    %c0_i32_0 = arith.constant 0 : i32
    %c0_i32_1 = arith.constant 0 : i32
    %c0_i32_2 = arith.constant 0 : i32
    return %arg0, %c0_i32, %c0_i32_0, %c0_i32_1 : i32, i32, i32, i32
  }
  func.func @transform_1(%arg0: i32) -> (i32, i32) {
    %c0_i32 = arith.constant 0 : i32
    %c0_i32_0 = arith.constant 0 : i32
    %c0_i32_1 = arith.constant 0 : i32
    return %c0_i32, %c0_i32_0 : i32, i32
  }
  func.func @transform_2(%arg0: i32) -> (i32, i32) {
    %c0_i32 = arith.constant 0 : i32
    %c0_i32_0 = arith.constant 0 : i32
    %c0_i32_1 = arith.constant 0 : i32
    return %c0_i32, %c0_i32_0 : i32, i32
  }
  func.func @transform_3(%arg0: i32) -> (i32, i32) {
    %c0_i32 = arith.constant 0 : i32
    %c0_i32_0 = arith.constant 0 : i32
    %c0_i32_1 = arith.constant 0 : i32
    return %c0_i32, %c0_i32_0 : i32, i32
  }
  func.func @transform_4(%arg0: i32) -> (i32, i32) {
    %c0_i32 = arith.constant 0 : i32
    %c0_i32_0 = arith.constant 0 : i32
    %c0_i32_1 = arith.constant 0 : i32
    return %c0_i32, %c0_i32_0 : i32, i32
  }
  func.func @transform_5(%arg0: i32) -> (i32, i32, i32, i32) {
    %c0_i32 = arith.constant 0 : i32
    %c0_i32_0 = arith.constant 0 : i32
    %c0_i32_1 = arith.constant 0 : i32
    %c0_i32_2 = arith.constant 0 : i32
    return %arg0, %c0_i32, %c0_i32_0, %c0_i32_1 : i32, i32, i32, i32
  }
  func.func @transform_6(%arg0: i32) -> (i32, i32, i32) {
    %c0_i32 = arith.constant 0 : i32
    %c0_i32_0 = arith.constant 0 : i32
    %c0_i32_1 = arith.constant 0 : i32
    return %arg0, %c0_i32, %c0_i32_0 : i32, i32, i32
  }
}

module attributes {stable_mosaic.version = 11 : i64} {
  func.func @head_kernel(%arg0: i32, %arg1: i32, %arg2: memref<2x64x128xbf16, #tpu.memory_space<vmem>>, %arg3: memref<1x128xf32, #tpu.memory_space<vmem>>, %arg4: memref<1x128xf32, #tpu.memory_space<vmem>>, %arg5: memref<128x128xbf16, #tpu.memory_space<vmem>>, %arg6: memref<1x128xf32, #tpu.memory_space<vmem>>, %arg7: memref<2x128xf32, #tpu.memory_space<vmem>>, %arg8: memref<2x128xf32, #tpu.memory_space<vmem>>) attributes {dimension_semantics = [#tpu.dimension_semantics<parallel>, #tpu.dimension_semantics<arbitrary>], iteration_bounds = array<i64: 1, 1>, scalar_prefetch = 0 : i64, scratch_operands = 1 : i64, tpu.core_type = #tpu.core_type<tc>, window_params = [{transform_indices = @transform_0, window_bounds = array<i64: 2, 64, 128>}, {pipeline_mode = #tpu.pipeline_mode<synchronous>, transform_indices = @transform_1, window_bounds = array<i64: 1, 128>}, {pipeline_mode = #tpu.pipeline_mode<synchronous>, transform_indices = @transform_2, window_bounds = array<i64: 1, 128>}, {pipeline_mode = #tpu.pipeline_mode<synchronous>, transform_indices = @transform_3, window_bounds = array<i64: 128, 128>}, {pipeline_mode = #tpu.pipeline_mode<synchronous>, transform_indices = @transform_4, window_bounds = array<i64: 1, 128>}, {transform_indices = @transform_5, window_bounds = array<i64: 2, 128>}]} {
    %c0_i32 = arith.constant 0 : i32
    %0 = arith.cmpi eq, %arg1, %c0_i32 : i32
    %1 = arith.extui %0 : i1 to i32
    %c0_i32_0 = arith.constant 0 : i32
    %2 = arith.cmpi ne, %1, %c0_i32_0 : i32
    scf.if %2 {
      %cst_9 = arith.constant 0.000000e+00 : f32
      %12 = vector.broadcast %cst_9 : f32 to vector<2x128xf32>
      %c0_10 = arith.constant 0 : index
      %c0_11 = arith.constant 0 : index
      %13 = vector.load %arg8[%c0_10, %c0_11] : memref<2x128xf32, #tpu.memory_space<vmem>>, vector<2x128xf32>
      tpu.vector_store %arg8[%c0_10, %c0_11], %12 {strides = array<i32>} : memref<2x128xf32, #tpu.memory_space<vmem>>, vector<2x128xf32>,
    } else {
    }
    %c0 = arith.constant 0 : index
    %c0_1 = arith.constant 0 : index
    %3 = vector.load %arg8[%c0, %c0_1] : memref<2x128xf32, #tpu.memory_space<vmem>>, vector<2x128xf32>
    %c0_2 = arith.constant 0 : index
    %c0_3 = arith.constant 0 : index
    %c0_4 = arith.constant 0 : index
    %4 = vector.load %arg2[%c0_2, %c0_3, %c0_4] : memref<2x64x128xbf16, #tpu.memory_space<vmem>>, vector<2x64x128xbf16>
    %5 = arith.extf %4 : vector<2x64x128xbf16> to vector<2x64x128xf32>
    %cst = arith.constant dense<0.000000e+00> : vector<2x128xf32>
    %6 = vector.multi_reduction <add>, %5, %cst [1] : vector<2x64x128xf32> to vector<2x128xf32>
    %7 = arith.addf %3, %6 : vector<2x128xf32>
    %c0_5 = arith.constant 0 : index
    %c0_6 = arith.constant 0 : index
    %8 = vector.load %arg8[%c0_5, %c0_6] : memref<2x128xf32, #tpu.memory_space<vmem>>, vector<2x128xf32>
    tpu.vector_store %arg8[%c0_5, %c0_6], %7 {strides = array<i32>} : memref<2x128xf32, #tpu.memory_space<vmem>>, vector<2x128xf32>,
    %c0_i32_7 = arith.constant 0 : i32
    %9 = arith.cmpi eq, %arg1, %c0_i32_7 : i32
    %10 = arith.extui %9 : i1 to i32
    %c0_i32_8 = arith.constant 0 : i32
    %11 = arith.cmpi ne, %10, %c0_i32_8 : i32
    scf.if %11 {
      %c0_9 = arith.constant 0 : index
      %c0_10 = arith.constant 0 : index
      %12 = vector.load %arg8[%c0_9, %c0_10] : memref<2x128xf32, #tpu.memory_space<vmem>>, vector<2x128xf32>
      %cst_11 = arith.constant 1.562500e-02 : f32
      %13 = vector.broadcast %cst_11 : f32 to vector<2x128xf32>
      %14 = arith.mulf %12, %13 : vector<2x128xf32>
      %c0_12 = arith.constant 0 : index
      %c0_13 = arith.constant 0 : index
      %15 = vector.load %arg3[%c0_12, %c0_13] : memref<1x128xf32, #tpu.memory_space<vmem>>, vector<1x128xf32>
      %16 = vector.broadcast %15 : vector<1x128xf32> to vector<2x128xf32>
      %17 = arith.mulf %14, %16 : vector<2x128xf32>
      %c0_14 = arith.constant 0 : index
      %c0_15 = arith.constant 0 : index
      %18 = vector.load %arg4[%c0_14, %c0_15] : memref<1x128xf32, #tpu.memory_space<vmem>>, vector<1x128xf32>
      %19 = vector.broadcast %18 : vector<1x128xf32> to vector<2x128xf32>
      %20 = arith.addf %17, %19 : vector<2x128xf32>
      %21 = arith.truncf %20 : vector<2x128xf32> to vector<2x128xbf16>
      %c0_16 = arith.constant 0 : index
      %c0_17 = arith.constant 0 : index
      %22 = vector.load %arg5[%c0_16, %c0_17] : memref<128x128xbf16, #tpu.memory_space<vmem>>, vector<128x128xbf16>
      %cst_18 = arith.constant dense<0.000000e+00> : vector<2x128xf32>
      %23 = tpu.matmul %21, %22, %cst_18 {dimension_numbers = #tpu.dot_dimension_numbers<[1], [0], [0], [1], [0, 0, 1, 1], [], []>} : vector<2x128xbf16>, vector<128x128xbf16>, vector<2x128xf32> -> vector<2x128xf32>
      %c0_19 = arith.constant 0 : index
      %c0_20 = arith.constant 0 : index
      %24 = vector.load %arg6[%c0_19, %c0_20] : memref<1x128xf32, #tpu.memory_space<vmem>>, vector<1x128xf32>
      %25 = vector.broadcast %24 : vector<1x128xf32> to vector<2x128xf32>
      %26 = arith.addf %23, %25 : vector<2x128xf32>
      %c0_21 = arith.constant 0 : index
      %c0_22 = arith.constant 0 : index
      %27 = vector.load %arg7[%c0_21, %c0_22] : memref<2x128xf32, #tpu.memory_space<vmem>>, vector<2x128xf32>
      tpu.vector_store %arg7[%c0_21, %c0_22], %26 {strides = array<i32>} : memref<2x128xf32, #tpu.memory_space<vmem>>, vector<2x128xf32>,
    } else {
    }
    return
  }
  func.func @transform_0(%arg0: i32, %arg1: i32) -> (i32, i32, i32) {
    %c0_i32 = arith.constant 0 : i32
    %c0_i32_0 = arith.constant 0 : i32
    return %arg0, %arg1, %c0_i32 : i32, i32, i32
  }
  func.func @transform_1(%arg0: i32, %arg1: i32) -> (i32, i32) {
    %c0_i32 = arith.constant 0 : i32
    %c0_i32_0 = arith.constant 0 : i32
    %c0_i32_1 = arith.constant 0 : i32
    return %c0_i32, %c0_i32_0 : i32, i32
  }
  func.func @transform_2(%arg0: i32, %arg1: i32) -> (i32, i32) {
    %c0_i32 = arith.constant 0 : i32
    %c0_i32_0 = arith.constant 0 : i32
    %c0_i32_1 = arith.constant 0 : i32
    return %c0_i32, %c0_i32_0 : i32, i32
  }
  func.func @transform_3(%arg0: i32, %arg1: i32) -> (i32, i32) {
    %c0_i32 = arith.constant 0 : i32
    %c0_i32_0 = arith.constant 0 : i32
    %c0_i32_1 = arith.constant 0 : i32
    return %c0_i32, %c0_i32_0 : i32, i32
  }
  func.func @transform_4(%arg0: i32, %arg1: i32) -> (i32, i32) {
    %c0_i32 = arith.constant 0 : i32
    %c0_i32_0 = arith.constant 0 : i32
    %c0_i32_1 = arith.constant 0 : i32
    return %c0_i32, %c0_i32_0 : i32, i32
  }
  func.func @transform_5(%arg0: i32, %arg1: i32) -> (i32, i32) {
    %c0_i32 = arith.constant 0 : i32
    %c0_i32_0 = arith.constant 0 : i32
    return %arg0, %c0_i32 : i32, i32
  }
}

</mosaic_0001>

<llo_original>
// kernel: convmixer_forward.6
$region0: #{convmixer_forward.6}
  #allocation0 [shape = 'u32[]', space=smem, size = 0x4, offset = 0x4, fixed_abs, tag = 'smem constant byte address 0x4 - core index']
  #allocation1 [shape = 'u32[144,128]{1,0:T(1,128)}', space=vmem, size = 0x12000, scoped, tag = 'internal scratch']
  %s0 = inlined_call_operand.vmem [shape: bf16[128,128], index: 0, kind: input, shape index: {}]
  %s1 = inlined_call_operand.vmem [shape: bf16[128,128], index: 1, kind: input, shape index: {}]
  %s2 = inlined_call_operand.vmem [shape: f32[1,128], index: 2, kind: input, shape index: {}]
  %s3 = inlined_call_operand.vmem [shape: bf16[128,128], index: 3, kind: output, shape index: {0}]
  %s4 = inlined_call_operand.vmem [shape: f32[1,2,128], index: 4, kind: output, shape index: {1}]
  %5 = xla_tuple %s3, %s4
  %s6 = sld [smem:[#allocation0]]
  $region30: #{convmixer_forward.6} parent=0
    _
  %s8 = ssub.s32 1, %s6
  %s9 = scalar_select 0, %s8, %s6
  // Predicated region
  $region2: #{convmixer_forward.6} parent=0 // pred_check
    _
  $region3: #{convmixer_forward.6} parent=0 // pred_check_branch
    %11 = sbr.rel (0) target = $region5
  $region4: #{convmixer_forward.6} parent=0 // pred_region
    _
  $region5: #{convmixer_forward.6} parent=0 // pred_fallthru
    _
  // Predicated region
  $region6: #{convmixer_forward.6} parent=0 // pred_check
    _
  $region7: #{convmixer_forward.6} parent=0 // pred_check_branch
    %13 = sbr.rel (0) target = $region9
  $region8: #{convmixer_forward.6} parent=0 // pred_region
    _
  $region9: #{convmixer_forward.6} parent=0 // pred_fallthru
    _
  // Predicated region
  $region10: #{convmixer_forward.6} parent=0 // pred_check
    _
  $region11: #{convmixer_forward.6} parent=0 // pred_check_branch
    %15 = sbr.rel (0) target = $region13
  $region12: #{convmixer_forward.6} parent=0 // pred_region
    _
  $region13: #{convmixer_forward.6} parent=0 // pred_fallthru
    _
  %v17 = vld [vmem:[%s0] sm:$0xf]
  %v18 = vld [vmem:[%s0 + $0x4] sm:$0xf]
  %v19 = vld [vmem:[%s0 + $0x8] sm:$0xf]
  %v20 = vld [vmem:[%s0 + $0xc] sm:$0xf]
  %v21 = vld [vmem:[%s0 + $0x10] sm:$0xf]
  %v22 = vld [vmem:[%s0 + $0x14] sm:$0xf]
  %v23 = vld [vmem:[%s0 + $0x18] sm:$0xf]
  %v24 = vld [vmem:[%s0 + $0x1c] sm:$0xf]
  %v25 = vld [vmem:[%s0 + $0x20] sm:$0xf]
  %v26 = vld [vmem:[%s0 + $0x24] sm:$0xf]
  %v27 = vld [vmem:[%s0 + $0x28] sm:$0xf]
  %v28 = vld [vmem:[%s0 + $0x2c] sm:$0xf]
  %v29 = vld [vmem:[%s0 + $0x30] sm:$0xf]
  %v30 = vld [vmem:[%s0 + $0x34] sm:$0xf]
  %v31 = vld [vmem:[%s0 + $0x38] sm:$0xf]
  %v32 = vld [vmem:[%s0 + $0x3c] sm:$0xf]
  %v33 = vld [vmem:[%s1] sm:$0xf]
  %v34 = vld [vmem:[%s1 + $0x4] sm:$0xf]
  %v35 = vld [vmem:[%s1 + $0x8] sm:$0xf]
  %v36 = vld [vmem:[%s1 + $0xc] sm:$0xf]
  %v37 = vld [vmem:[%s1 + $0x10] sm:$0xf]
  %v38 = vld [vmem:[%s1 + $0x14] sm:$0xf]
  %v39 = vld [vmem:[%s1 + $0x18] sm:$0xf]
  %v40 = vld [vmem:[%s1 + $0x1c] sm:$0xf]
  %v41 = vld [vmem:[%s1 + $0x20] sm:$0xf]
  %v42 = vld [vmem:[%s1 + $0x24] sm:$0xf]
  %v43 = vld [vmem:[%s1 + $0x28] sm:$0xf]
  %v44 = vld [vmem:[%s1 + $0x2c] sm:$0xf]
  %v45 = vld [vmem:[%s1 + $0x30] sm:$0xf]
  %v46 = vld [vmem:[%s1 + $0x34] sm:$0xf]
  %v47 = vld [vmem:[%s1 + $0x38] sm:$0xf]
  %v48 = vld [vmem:[%s1 + $0x3c] sm:$0xf]
  %v49 = vld [vmem:[%s2] sm:$0x1]
  %v51 = vlaneseq
  %v52 = vshrl.u32 %v51, 7
  %v53 = vsub.s32 0, %v52
  %v54 = vrot.slane %v49, %v53
  %v72 = vunpack.c.l.b16 %v17
  %v73 = vunpack.c.l.b16 %v18
  %v74 = vunpack.c.l.b16 %v19
  %v75 = vunpack.c.l.b16 %v20
  %v76 = vunpack.c.l.b16 %v21
  %v77 = vunpack.c.l.b16 %v22
  %v78 = vunpack.c.l.b16 %v23
  %v79 = vunpack.c.l.b16 %v24
  %v80 = vunpack.c.l.b16 %v25
  %v81 = vunpack.c.l.b16 %v26
  %v82 = vunpack.c.l.b16 %v27
  %v83 = vunpack.c.l.b16 %v28
  %v84 = vunpack.c.l.b16 %v29
  %v85 = vunpack.c.l.b16 %v30
  %v86 = vunpack.c.l.b16 %v31
  %v87 = vunpack.c.l.b16 %v32
  %v88 = vpack.c.b16 %v73, %v72
  %v89 = vpack.c.b16 %v75, %v74
  %v90 = vpack.c.b16 %v77, %v76
  %v91 = vpack.c.b16 %v79, %v78
  %v92 = vpack.c.b16 %v81, %v80
  %v93 = vpack.c.b16 %v83, %v82
  %v94 = vpack.c.b16 %v85, %v84
  %v95 = vpack.c.b16 %v87, %v86
  %v120 = vunpack.c.l.b16 %v33
  %v121 = vunpack.c.l.b16 %v34
  %v122 = vunpack.c.l.b16 %v35
  %v123 = vunpack.c.l.b16 %v36
  %v124 = vunpack.c.l.b16 %v37
  %v125 = vunpack.c.l.b16 %v38
  %v126 = vunpack.c.l.b16 %v39
  %v127 = vunpack.c.l.b16 %v40
  %v128 = vunpack.c.l.b16 %v41
  %v129 = vunpack.c.l.b16 %v42
  %v130 = vunpack.c.l.b16 %v43
  %v131 = vunpack.c.l.b16 %v44
  %v132 = vunpack.c.l.b16 %v45
  %v133 = vunpack.c.l.b16 %v46
  %v134 = vunpack.c.l.b16 %v47
  %v135 = vunpack.c.l.b16 %v48
  %v136 = vpack.c.b16 %v121, %v120
  %v137 = vpack.c.b16 %v123, %v122
  %v138 = vpack.c.b16 %v125, %v124
  %v139 = vpack.c.b16 %v127, %v126
  %v140 = vpack.c.b16 %v129, %v128
  %v141 = vpack.c.b16 %v131, %v130
  %v142 = vpack.c.b16 %v133, %v132
  %v143 = vpack.c.b16 %v135, %v134
  %152 = vmatprep.subr.bf16.mxu0 0
  %153 = vmatpush1.bf16.msra.mxu0 %v136
  %154 = vmatprep.subr.bf16.mxu0 0
  %155 = vmatpush1.bf16.msra.mxu0 %v137
  %156 = vmatprep.subr.bf16.mxu0 0
  %157 = vmatpush1.bf16.msra.mxu0 %v138
  %158 = vmatprep.subr.bf16.mxu0 0
  %159 = vmatpush1.bf16.msra.mxu0 %v139
  %160 = vmatprep.subr.bf16.mxu0 0
  %161 = vmatpush1.bf16.msra.mxu0 %v140
  %162 = vmatprep.subr.bf16.mxu0 0
  %163 = vmatpush1.bf16.msra.mxu0 %v141
  %164 = vmatprep.subr.bf16.mxu0 0
  %165 = vmatpush1.bf16.msra.mxu0 %v142
  %166 = vmatprep.subr.bf16.mxu0 0
  %167 = vmatpush1.bf16.msra.mxu0 %v143
  %168 = vmatprep.subr.bf16.mxu0 0
  %169 = vmatpush1.bf16.msra.mxu0 0
  %170 = vmatprep.subr.bf16.mxu0 0
  %171 = vmatpush1.bf16.msra.mxu0 0
  %172 = vmatprep.subr.bf16.mxu0 0
  %173 = vmatpush1.bf16.msra.mxu0 0
  %174 = vmatprep.subr.bf16.mxu0 0
  %175 = vmatpush1.bf16.msra.mxu0 0
  %176 = vmatprep.subr.bf16.mxu0 0
  %177 = vmatpush1.bf16.msra.mxu0 0
  %178 = vmatprep.subr.bf16.mxu0 0
  %179 = vmatpush1.bf16.msra.mxu0 0
  %180 = vmatprep.subr.bf16.mxu0 0
  %181 = vmatpush1.bf16.msra.mxu0 0
  %182 = vmatprep.subr.bf16.mxu0 0
  %183 = vmatpush1.bf16.msra.mxu0 0
  %184 = vmatprep.mubr.bf16.mxu0 0
  %185 = vmatmul.mubr.bf16.gmra.mrb[0].mxu0 %v88
  %v186 = vpop.f32.mrb[0].mxu0
  %v187 = vadd.f32 %v54, %v186
  %v188 = vpop.f32.mrb[0].mxu0
  %v189 = vpop.f32.mrb[0].mxu0
  %v190 = vadd.f32 %v54, %v189
  %v191 = vpop.f32.mrb[0].mxu0
  %192 = vmatprep.mubr.bf16.mxu0 0
  %193 = vmatmul.mubr.bf16.gmra.mrb[0].mxu0 %v89
  %v194 = vpop.f32.mrb[0].mxu0
  %v195 = vadd.f32 %v54, %v194
  %v196 = vpop.f32.mrb[0].mxu0
  %v197 = vpop.f32.mrb[0].mxu0
  %v198 = vadd.f32 %v54, %v197
  %v199 = vpop.f32.mrb[0].mxu0
  %200 = vmatprep.mubr.bf16.mxu0 0
  %201 = vmatmul.mubr.bf16.gmra.mrb[0].mxu0 %v90
  %v202 = vpop.f32.mrb[0].mxu0
  %v203 = vadd.f32 %v54, %v202
  %v204 = vpop.f32.mrb[0].mxu0
  %v205 = vpop.f32.mrb[0].mxu0
  %v206 = vadd.f32 %v54, %v205
  %v207 = vpop.f32.mrb[0].mxu0
  %208 = vmatprep.mubr.bf16.mxu0 0
  %209 = vmatmul.mubr.bf16.gmra.mrb[0].mxu0 %v91
  %v210 = vpop.f32.mrb[0].mxu0
  %v211 = vadd.f32 %v54, %v210
  %v212 = vpop.f32.mrb[0].mxu0
  %v213 = vpop.f32.mrb[0].mxu0
  %v214 = vadd.f32 %v54, %v213
  %v215 = vpop.f32.mrb[0].mxu0
  %216 = vmatprep.mubr.bf16.mxu0 0
  %217 = vmatmul.mubr.bf16.gmra.mrb[0].mxu0 %v92
  %v218 = vpop.f32.mrb[0].mxu0
  %v219 = vadd.f32 %v54, %v218
  %v220 = vpop.f32.mrb[0].mxu0
  %v221 = vpop.f32.mrb[0].mxu0
  %v222 = vadd.f32 %v54, %v221
  %v223 = vpop.f32.mrb[0].mxu0
  %224 = vmatprep.mubr.bf16.mxu0 0
  %225 = vmatmul.mubr.bf16.gmra.mrb[0].mxu0 %v93
  %v226 = vpop.f32.mrb[0].mxu0
  %v227 = vadd.f32 %v54, %v226
  %v228 = vpop.f32.mrb[0].mxu0
  %v229 = vpop.f32.mrb[0].mxu0
  %v230 = vadd.f32 %v54, %v229
  %v231 = vpop.f32.mrb[0].mxu0
  %232 = vmatprep.mubr.bf16.mxu0 0
  %233 = vmatmul.mubr.bf16.gmra.mrb[0].mxu0 %v94
  %v234 = vpop.f32.mrb[0].mxu0
  %v235 = vadd.f32 %v54, %v234
  %v236 = vpop.f32.mrb[0].mxu0
  %v237 = vpop.f32.mrb[0].mxu0
  %v238 = vadd.f32 %v54, %v237
  %v239 = vpop.f32.mrb[0].mxu0
  %240 = vmatprep.mubr.bf16.mxu0 0
  %241 = vmatmul.mubr.bf16.gmra.mrb[0].mxu0 %v95
  %v242 = vpop.f32.mrb[0].mxu0
  %v243 = vadd.f32 %v54, %v242
  %v244 = vpop.f32.mrb[0].mxu0
  %v245 = vpop.f32.mrb[0].mxu0
  %v246 = vadd.f32 %v54, %v245
  %v247 = vpop.f32.mrb[0].mxu0
  %248 = vdwg.mxu0
  %v249 = vmax.f32 %v187, 0.0
  %v250 = vmax.f32 %v190, 0.0
  %v251 = vmax.f32 %v195, 0.0
  %v252 = vmax.f32 %v198, 0.0
  %v253 = vmax.f32 %v203, 0.0
  %v254 = vmax.f32 %v206, 0.0
  %v255 = vmax.f32 %v211, 0.0
  %v256 = vmax.f32 %v214, 0.0
  %v257 = vmax.f32 %v219, 0.0
  %v258 = vmax.f32 %v222, 0.0
  %v259 = vmax.f32 %v227, 0.0
  %v260 = vmax.f32 %v230, 0.0
  %v261 = vmax.f32 %v235, 0.0
  %v262 = vmax.f32 %v238, 0.0
  %v263 = vmax.f32 %v243, 0.0
  %v264 = vmax.f32 %v246, 0.0
  %v265 = vpack.c.bf16 %v250, %v249
  %v266 = vpack.c.bf16 %v252, %v251
  %v267 = vpack.c.bf16 %v254, %v253
  %v268 = vpack.c.bf16 %v256, %v255
  %v269 = vpack.c.bf16 %v258, %v257
  %v270 = vpack.c.bf16 %v260, %v259
  %v271 = vpack.c.bf16 %v262, %v261
  %v272 = vpack.c.bf16 %v264, %v263
  %v281 = vunpack.c.l.b16 %v265
  %v282 = vunpack.c.h.b16 %v265
  %v283 = vunpack.c.l.b16 %v266
  %v284 = vunpack.c.h.b16 %v266
  %v285 = vunpack.c.l.b16 %v267
  %v286 = vunpack.c.h.b16 %v267
  %v287 = vunpack.c.l.b16 %v268
  %v288 = vunpack.c.h.b16 %v268
  %v289 = vunpack.c.l.b16 %v269
  %v290 = vunpack.c.h.b16 %v269
  %v291 = vunpack.c.l.b16 %v270
  %v292 = vunpack.c.h.b16 %v270
  %v293 = vunpack.c.l.b16 %v271
  %v294 = vunpack.c.h.b16 %v271
  %v295 = vunpack.c.l.b16 %v272
  %v296 = vunpack.c.h.b16 %v272
  %v297 = vpack.c.b16 %v281, %v281
  %v298 = vpack.c.b16 %v282, %v282
  %v299 = vpack.c.b16 %v283, %v283
  %v300 = vpack.c.b16 %v284, %v284
  %v301 = vpack.c.b16 %v285, %v285
  %v302 = vpack.c.b16 %v286, %v286
  %v303 = vpack.c.b16 %v287, %v287
  %v304 = vpack.c.b16 %v288, %v288
  %v305 = vpack.c.b16 %v289, %v289
  %v306 = vpack.c.b16 %v290, %v290
  %v307 = vpack.c.b16 %v291, %v291
  %v308 = vpack.c.b16 %v292, %v292
  %v309 = vpack.c.b16 %v293, %v293
  %v310 = vpack.c.b16 %v294, %v294
  %v311 = vpack.c.b16 %v295, %v295
  %v312 = vpack.c.b16 %v296, %v296
  %329 = vst [vmem:[%s3] sm:$0xf] %v297
  %330 = vst [vmem:[%s3 + $0x4] sm:$0xf] %v298
  %331 = vst [vmem:[%s3 + $0x8] sm:$0xf] %v299
  %332 = vst [vmem:[%s3 + $0xc] sm:$0xf] %v300
  %333 = vst [vmem:[%s3 + $0x10] sm:$0xf] %v301
  %334 = vst [vmem:[%s3 + $0x14] sm:$0xf] %v302
  %335 = vst [vmem:[%s3 + $0x18] sm:$0xf] %v303
  %336 = vst [vmem:[%s3 + $0x1c] sm:$0xf] %v304
  %337 = vst [vmem:[%s3 + $0x20] sm:$0xf] %v305
  %338 = vst [vmem:[%s3 + $0x24] sm:$0xf] %v306
  %339 = vst [vmem:[%s3 + $0x28] sm:$0xf] %v307
  %340 = vst [vmem:[%s3 + $0x2c] sm:$0xf] %v308
  %341 = vst [vmem:[%s3 + $0x30] sm:$0xf] %v309
  %342 = vst [vmem:[%s3 + $0x34] sm:$0xf] %v310
  %343 = vst [vmem:[%s3 + $0x38] sm:$0xf] %v311
  %344 = vst [vmem:[%s3 + $0x3c] sm:$0xf] %v312
  %v345 = vadd.f32 %v249, %v250
  %v346 = vadd.f32 %v345, %v251
  %v347 = vadd.f32 %v346, %v252
  %v348 = vadd.f32 %v347, %v253
  %v349 = vadd.f32 %v348, %v254
  %v350 = vadd.f32 %v349, %v255
  %v351 = vadd.f32 %v350, %v256
  %v352 = vadd.f32 %v351, %v257
  %v353 = vadd.f32 %v352, %v258
  %v354 = vadd.f32 %v353, %v259
  %v355 = vadd.f32 %v354, %v260
  %v356 = vadd.f32 %v355, %v261
  %v357 = vadd.f32 %v356, %v262
  %v358 = vadd.f32 %v357, %v263
  %v359 = vadd.f32 %v358, %v264
  %v360 = vrot.slane %v359, 4
  %v361 = vadd.f32 %v359, %v360
  %v362 = vrot.slane %v361, 2
  %v363 = vadd.f32 %v361, %v362
  %v364 = vrot.slane %v363, 1
  %v365 = vadd.f32 %v363, %v364
  %v366 = vmul.f32 %v249, %v249
  %v367 = vmul.f32 %v250, %v250
  %v368 = vmul.f32 %v251, %v251
  %v369 = vmul.f32 %v252, %v252
  %v370 = vmul.f32 %v253, %v253
  %v371 = vmul.f32 %v254, %v254
  %v372 = vmul.f32 %v255, %v255
  %v373 = vmul.f32 %v256, %v256
  %v374 = vmul.f32 %v257, %v257
  %v375 = vmul.f32 %v258, %v258
  %v376 = vmul.f32 %v259, %v259
  %v377 = vmul.f32 %v260, %v260
  %v378 = vmul.f32 %v261, %v261
  %v379 = vmul.f32 %v262, %v262
  %v380 = vmul.f32 %v263, %v263
  %v381 = vmul.f32 %v264, %v264
  %v382 = vadd.f32 %v366, %v367
  %v383 = vadd.f32 %v382, %v368
  %v384 = vadd.f32 %v383, %v369
  %v385 = vadd.f32 %v384, %v370
  %v386 = vadd.f32 %v385, %v371
  %v387 = vadd.f32 %v386, %v372
  %v388 = vadd.f32 %v387, %v373
  %v389 = vadd.f32 %v388, %v374
  %v390 = vadd.f32 %v389, %v375
  %v391 = vadd.f32 %v390, %v376
  %v392 = vadd.f32 %v391, %v377
  %v393 = vadd.f32 %v392, %v378
  %v394 = vadd.f32 %v393, %v379
  %v395 = vadd.f32 %v394, %v380
  %v396 = vadd.f32 %v395, %v381
  %v397 = vrot.slane %v396, 4
  %v398 = vadd.f32 %v396, %v397
  %v399 = vrot.slane %v398, 2
  %v400 = vadd.f32 %v398, %v399
  %v401 = vrot.slane %v400, 1
  %v402 = vadd.f32 %v400, %v401
  %vm403 = vcmask 1040384
  %v404 = vsel %vm403, %v365, %v402
  %405 = vst [vmem:[%s4] sm:$0x3] %v404
  // Predicated region
  $region14: #{convmixer_forward.6} parent=0 // pred_check
    _
  $region15: #{convmixer_forward.6} parent=0 // pred_check_branch
    %407 = sbr.rel (0) target = $region17
  $region16: #{convmixer_forward.6} parent=0 // pred_region
    _
  $region17: #{convmixer_forward.6} parent=0 // pred_fallthru
    _
  // Predicated region
  $region18: #{convmixer_forward.6} parent=0 // pred_check
    _
  $region19: #{convmixer_forward.6} parent=0 // pred_check_branch
    %409 = sbr.rel (0) target = $region21
  $region20: #{convmixer_forward.6} parent=0 // pred_region
    _
  $region21: #{convmixer_forward.6} parent=0 // pred_fallthru
    _
  // Predicated region
  $region22: #{convmixer_forward.6} parent=0 // pred_check
    _
  $region23: #{convmixer_forward.6} parent=0 // pred_check_branch
    %411 = sbr.rel (0) target = $region25
  $region24: #{convmixer_forward.6} parent=0 // pred_region
    _
  $region25: #{convmixer_forward.6} parent=0 // pred_fallthru
    _
  // Predicated region
  $region26: #{convmixer_forward.6} parent=0 // pred_check
    _
  $region27: #{convmixer_forward.6} parent=0 // pred_check_branch
    %413 = sbr.rel (0) target = $region29
  $region28: #{convmixer_forward.6} parent=0 // pred_region
    _
  $region29: #{convmixer_forward.6} parent=0 // pred_fallthru
    _

// kernel: convmixer_forward.8
$region0: #{convmixer_forward.8}
  #allocation0 [shape = 'u32[]', space=smem, size = 0x4, offset = 0x4, fixed_abs, tag = 'smem constant byte address 0x4 - core index']
  #allocation1 [shape = 'u32[144,128]{1,0:T(1,128)}', space=vmem, size = 0x12000, scoped, tag = 'internal scratch']
  %s0 = inlined_call_operand.vmem [shape: bf16[128,128], index: 0, kind: input, shape index: {}]
  %s1 = inlined_call_operand.vmem [shape: bf16[128,128], index: 1, kind: input, shape index: {}]
  %s2 = inlined_call_operand.vmem [shape: f32[1,128], index: 2, kind: input, shape index: {}]
  %s3 = inlined_call_operand.vmem [shape: f32[1,128], index: 3, kind: input, shape index: {}]
  %s4 = inlined_call_operand.vmem [shape: f32[1,128], index: 4, kind: input, shape index: {}]
  %s5 = inlined_call_operand.vmem [shape: f32[1,128], index: 5, kind: input, shape index: {}]
  %s6 = inlined_call_operand.vmem [shape: bf16[128,128], index: 6, kind: input, shape index: {}]
  %s7 = inlined_call_operand.vmem [shape: f32[1,128], index: 7, kind: input, shape index: {}]
  %s8 = inlined_call_operand.vmem [shape: bf16[128,128], index: 8, kind: output, shape index: {0}]
  %s9 = inlined_call_operand.vmem [shape: f32[1,2,128], index: 9, kind: output, shape index: {1}]
  %10 = xla_tuple %s8, %s9
  %s11 = sld [smem:[#allocation0]]
  $region50: #{convmixer_forward.8} parent=0
    _
  %s13 = ssub.s32 1, %s11
  %s14 = scalar_select 0, %s13, %s11
  // Predicated region
  $region2: #{convmixer_forward.8} parent=0 // pred_check
    _
  $region3: #{convmixer_forward.8} parent=0 // pred_check_branch
    %16 = sbr.rel (0) target = $region5
  $region4: #{convmixer_forward.8} parent=0 // pred_region
    _
  $region5: #{convmixer_forward.8} parent=0 // pred_fallthru
    _
  // Predicated region
  $region6: #{convmixer_forward.8} parent=0 // pred_check
    _
  $region7: #{convmixer_forward.8} parent=0 // pred_check_branch
    %18 = sbr.rel (0) target = $region9
  $region8: #{convmixer_forward.8} parent=0 // pred_region
    _
  $region9: #{convmixer_forward.8} parent=0 // pred_fallthru
    _
  // Predicated region
  $region10: #{convmixer_forward.8} parent=0 // pred_check
    _
  $region11: #{convmixer_forward.8} parent=0 // pred_check_branch
    %20 = sbr.rel (0) target = $region13
  $region12: #{convmixer_forward.8} parent=0 // pred_region
    _
  $region13: #{convmixer_forward.8} parent=0 // pred_fallthru
    _
  // Predicated region
  $region14: #{convmixer_forward.8} parent=0 // pred_check
    _
  $region15: #{convmixer_forward.8} parent=0 // pred_check_branch
    %22 = sbr.rel (0) target = $region17
  $region16: #{convmixer_forward.8} parent=0 // pred_region
    _
  $region17: #{convmixer_forward.8} parent=0 // pred_fallthru
    _
  // Predicated region
  $region18: #{convmixer_forward.8} parent=0 // pred_check
    _
  $region19: #{convmixer_forward.8} parent=0 // pred_check_branch
    %24 = sbr.rel (0) target = $region21
  $region20: #{convmixer_forward.8} parent=0 // pred_region
    _
  $region21: #{convmixer_forward.8} parent=0 // pred_fallthru
    _
  // Predicated region
  $region22: #{convmixer_forward.8} parent=0 // pred_check
    _
  $region23: #{convmixer_forward.8} parent=0 // pred_check_branch
    %26 = sbr.rel (0) target = $region25
  $region24: #{convmixer_forward.8} parent=0 // pred_region
    _
  $region25: #{convmixer_forward.8} parent=0 // pred_fallthru
    _
  // Predicated region
  $region26: #{convmixer_forward.8} parent=0 // pred_check
    _
  $region27: #{convmixer_forward.8} parent=0 // pred_check_branch
    %28 = sbr.rel (0) target = $region29
  $region28: #{convmixer_forward.8} parent=0 // pred_region
    _
  $region29: #{convmixer_forward.8} parent=0 // pred_fallthru
    _
  // Predicated region
  $region30: #{convmixer_forward.8} parent=0 // pred_check
    _
  $region31: #{convmixer_forward.8} parent=0 // pred_check_branch
    %30 = sbr.rel (0) target = $region33
  $region32: #{convmixer_forward.8} parent=0 // pred_region
    _
  $region33: #{convmixer_forward.8} parent=0 // pred_fallthru
    _
  %v32 = vld [vmem:[%s0] sm:$0xf]
  %v33 = vld [vmem:[%s0 + $0x4] sm:$0xf]
  %v34 = vld [vmem:[%s0 + $0x8] sm:$0xf]
  %v35 = vld [vmem:[%s0 + $0xc] sm:$0xf]
  %v36 = vld [vmem:[%s0 + $0x10] sm:$0xf]
  %v37 = vld [vmem:[%s0 + $0x14] sm:$0xf]
  %v38 = vld [vmem:[%s0 + $0x18] sm:$0xf]
  %v39 = vld [vmem:[%s0 + $0x1c] sm:$0xf]
  %v40 = vld [vmem:[%s0 + $0x20] sm:$0xf]
  %v41 = vld [vmem:[%s0 + $0x24] sm:$0xf]
  %v42 = vld [vmem:[%s0 + $0x28] sm:$0xf]
  %v43 = vld [vmem:[%s0 + $0x2c] sm:$0xf]
  %v44 = vld [vmem:[%s0 + $0x30] sm:$0xf]
  %v45 = vld [vmem:[%s0 + $0x34] sm:$0xf]
  %v46 = vld [vmem:[%s0 + $0x38] sm:$0xf]
  %v47 = vld [vmem:[%s0 + $0x3c] sm:$0xf]
  %v48 = vunpack.c.l.bf16 %v32
  %v49 = vunpack.c.l.bf16 %v33
  %v50 = vunpack.c.l.bf16 %v34
  %v51 = vunpack.c.l.bf16 %v35
  %v52 = vunpack.c.l.bf16 %v36
  %v53 = vunpack.c.l.bf16 %v37
  %v54 = vunpack.c.l.bf16 %v38
  %v55 = vunpack.c.l.bf16 %v39
  %v56 = vunpack.c.l.bf16 %v40
  %v57 = vunpack.c.l.bf16 %v41
  %v58 = vunpack.c.l.bf16 %v42
  %v59 = vunpack.c.l.bf16 %v43
  %v60 = vunpack.c.l.bf16 %v44
  %v61 = vunpack.c.l.bf16 %v45
  %v62 = vunpack.c.l.bf16 %v46
  %v63 = vunpack.c.l.bf16 %v47
  %v64 = vld [vmem:[%s2] sm:$0x1]
  %v66 = vlaneseq
  %v67 = vshrl.u32 %v66, 7
  %v68 = vsub.s32 0, %v67
  %v69 = vrot.slane %v64, %v68
  %v71 = vmul.f32 %v48, %v69
  %v72 = vmul.f32 %v49, %v69
  %v73 = vmul.f32 %v50, %v69
  %v74 = vmul.f32 %v51, %v69
  %v75 = vmul.f32 %v52, %v69
  %v76 = vmul.f32 %v53, %v69
  %v77 = vmul.f32 %v54, %v69
  %v78 = vmul.f32 %v55, %v69
  %v79 = vmul.f32 %v56, %v69
  %v80 = vmul.f32 %v57, %v69
  %v81 = vmul.f32 %v58, %v69
  %v82 = vmul.f32 %v59, %v69
  %v83 = vmul.f32 %v60, %v69
  %v84 = vmul.f32 %v61, %v69
  %v85 = vmul.f32 %v62, %v69
  %v86 = vmul.f32 %v63, %v69
  %v87 = vld [vmem:[%s3] sm:$0x1]
  %v89 = vlaneseq
  %v90 = vshrl.u32 %v89, 7
  %v91 = vsub.s32 0, %v90
  %v92 = vrot.slane %v87, %v91
  %v94 = vadd.f32 %v71, %v92
  %v95 = vadd.f32 %v72, %v92
  %v96 = vadd.f32 %v73, %v92
  %v97 = vadd.f32 %v74, %v92
  %v98 = vadd.f32 %v75, %v92
  %v99 = vadd.f32 %v76, %v92
  %v100 = vadd.f32 %v77, %v92
  %v101 = vadd.f32 %v78, %v92
  %v102 = vadd.f32 %v79, %v92
  %v103 = vadd.f32 %v80, %v92
  %v104 = vadd.f32 %v81, %v92
  %v105 = vadd.f32 %v82, %v92
  %v106 = vadd.f32 %v83, %v92
  %v107 = vadd.f32 %v84, %v92
  %v108 = vadd.f32 %v85, %v92
  %v109 = vadd.f32 %v86, %v92
  %v110 = vld [vmem:[%s1] sm:$0xf]
  %v111 = vld [vmem:[%s1 + $0x4] sm:$0xf]
  %v112 = vld [vmem:[%s1 + $0x8] sm:$0xf]
  %v113 = vld [vmem:[%s1 + $0xc] sm:$0xf]
  %v114 = vld [vmem:[%s1 + $0x10] sm:$0xf]
  %v115 = vld [vmem:[%s1 + $0x14] sm:$0xf]
  %v116 = vld [vmem:[%s1 + $0x18] sm:$0xf]
  %v117 = vld [vmem:[%s1 + $0x1c] sm:$0xf]
  %v118 = vld [vmem:[%s1 + $0x20] sm:$0xf]
  %v119 = vld [vmem:[%s1 + $0x24] sm:$0xf]
  %v120 = vld [vmem:[%s1 + $0x28] sm:$0xf]
  %v121 = vld [vmem:[%s1 + $0x2c] sm:$0xf]
  %v122 = vld [vmem:[%s1 + $0x30] sm:$0xf]
  %v123 = vld [vmem:[%s1 + $0x34] sm:$0xf]
  %v124 = vld [vmem:[%s1 + $0x38] sm:$0xf]
  %v125 = vld [vmem:[%s1 + $0x3c] sm:$0xf]
  %v126 = vunpack.c.l.bf16 %v110
  %v127 = vunpack.c.l.bf16 %v111
  %v128 = vunpack.c.l.bf16 %v112
  %v129 = vunpack.c.l.bf16 %v113
  %v130 = vunpack.c.l.bf16 %v114
  %v131 = vunpack.c.l.bf16 %v115
  %v132 = vunpack.c.l.bf16 %v116
  %v133 = vunpack.c.l.bf16 %v117
  %v134 = vunpack.c.l.bf16 %v118
  %v135 = vunpack.c.l.bf16 %v119
  %v136 = vunpack.c.l.bf16 %v120
  %v137 = vunpack.c.l.bf16 %v121
  %v138 = vunpack.c.l.bf16 %v122
  %v139 = vunpack.c.l.bf16 %v123
  %v140 = vunpack.c.l.bf16 %v124
  %v141 = vunpack.c.l.bf16 %v125
  %v142 = vld [vmem:[%s4] sm:$0x1]
  %v144 = vlaneseq
  %v145 = vshrl.u32 %v144, 7
  %v146 = vsub.s32 0, %v145
  %v147 = vrot.slane %v142, %v146
  %v149 = vmul.f32 %v126, %v147
  %v150 = vmul.f32 %v127, %v147
  %v151 = vmul.f32 %v128, %v147
  %v152 = vmul.f32 %v129, %v147
  %v153 = vmul.f32 %v130, %v147
  %v154 = vmul.f32 %v131, %v147
  %v155 = vmul.f32 %v132, %v147
  %v156 = vmul.f32 %v133, %v147
  %v157 = vmul.f32 %v134, %v147
  %v158 = vmul.f32 %v135, %v147
  %v159 = vmul.f32 %v136, %v147
  %v160 = vmul.f32 %v137, %v147
  %v161 = vmul.f32 %v138, %v147
  %v162 = vmul.f32 %v139, %v147
  %v163 = vmul.f32 %v140, %v147
  %v164 = vmul.f32 %v141, %v147
  %v165 = vadd.f32 %v94, %v149
  %v166 = vadd.f32 %v95, %v150
  %v167 = vadd.f32 %v96, %v151
  %v168 = vadd.f32 %v97, %v152
  %v169 = vadd.f32 %v98, %v153
  %v170 = vadd.f32 %v99, %v154
  %v171 = vadd.f32 %v100, %v155
  %v172 = vadd.f32 %v101, %v156
  %v173 = vadd.f32 %v102, %v157
  %v174 = vadd.f32 %v103, %v158
  %v175 = vadd.f32 %v104, %v159
  %v176 = vadd.f32 %v105, %v160
  %v177 = vadd.f32 %v106, %v161
  %v178 = vadd.f32 %v107, %v162
  %v179 = vadd.f32 %v108, %v163
  %v180 = vadd.f32 %v109, %v164
  %v181 = vld [vmem:[%s5] sm:$0x1]
  %v183 = vlaneseq
  %v184 = vshrl.u32 %v183, 7
  %v185 = vsub.s32 0, %v184
  %v186 = vrot.slane %v181, %v185
  %v188 = vadd.f32 %v165, %v186
  %v189 = vadd.f32 %v166, %v186
  %v190 = vadd.f32 %v167, %v186
  %v191 = vadd.f32 %v168, %v186
  %v192 = vadd.f32 %v169, %v186
  %v193 = vadd.f32 %v170, %v186
  %v194 = vadd.f32 %v171, %v186
  %v195 = vadd.f32 %v172, %v186
  %v196 = vadd.f32 %v173, %v186
  %v197 = vadd.f32 %v174, %v186
  %v198 = vadd.f32 %v175, %v186
  %v199 = vadd.f32 %v176, %v186
  %v200 = vadd.f32 %v177, %v186
  %v201 = vadd.f32 %v178, %v186
  %v202 = vadd.f32 %v179, %v186
  %v203 = vadd.f32 %v180, %v186
  %v204 = vpack.c.bf16 %v189, %v188
  %v205 = vpack.c.bf16 %v191, %v190
  %v206 = vpack.c.bf16 %v193, %v192
  %v207 = vpack.c.bf16 %v195, %v194
  %v208 = vpack.c.bf16 %v197, %v196
  %v209 = vpack.c.bf16 %v199, %v198
  %v210 = vpack.c.bf16 %v201, %v200
  %v211 = vpack.c.bf16 %v203, %v202
  %v212 = vld [vmem:[%s6] sm:$0xf]
  %v213 = vld [vmem:[%s6 + $0x4] sm:$0xf]
  %v214 = vld [vmem:[%s6 + $0x8] sm:$0xf]
  %v215 = vld [vmem:[%s6 + $0xc] sm:$0xf]
  %v216 = vld [vmem:[%s6 + $0x10] sm:$0xf]
  %v217 = vld [vmem:[%s6 + $0x14] sm:$0xf]
  %v218 = vld [vmem:[%s6 + $0x18] sm:$0xf]
  %v219 = vld [vmem:[%s6 + $0x1c] sm:$0xf]
  %v220 = vld [vmem:[%s6 + $0x20] sm:$0xf]
  %v221 = vld [vmem:[%s6 + $0x24] sm:$0xf]
  %v222 = vld [vmem:[%s6 + $0x28] sm:$0xf]
  %v223 = vld [vmem:[%s6 + $0x2c] sm:$0xf]
  %v224 = vld [vmem:[%s6 + $0x30] sm:$0xf]
  %v225 = vld [vmem:[%s6 + $0x34] sm:$0xf]
  %v226 = vld [vmem:[%s6 + $0x38] sm:$0xf]
  %v227 = vld [vmem:[%s6 + $0x3c] sm:$0xf]
  %v228 = vld [vmem:[%s7] sm:$0x1]
  %v230 = vlaneseq
  %v231 = vshrl.u32 %v230, 7
  %v232 = vsub.s32 0, %v231
  %v233 = vrot.slane %v228, %v232
  %v251 = vunpack.c.l.b16 %v212
  %v252 = vunpack.c.l.b16 %v213
  %v253 = vunpack.c.l.b16 %v214
  %v254 = vunpack.c.l.b16 %v215
  %v255 = vunpack.c.l.b16 %v216
  %v256 = vunpack.c.l.b16 %v217
  %v257 = vunpack.c.l.b16 %v218
  %v258 = vunpack.c.l.b16 %v219
  %v259 = vunpack.c.l.b16 %v220
  %v260 = vunpack.c.l.b16 %v221
  %v261 = vunpack.c.l.b16 %v222
  %v262 = vunpack.c.l.b16 %v223
  %v263 = vunpack.c.l.b16 %v224
  %v264 = vunpack.c.l.b16 %v225
  %v265 = vunpack.c.l.b16 %v226
  %v266 = vunpack.c.l.b16 %v227
  %v267 = vpack.c.b16 %v252, %v251
  %v268 = vpack.c.b16 %v254, %v253
  %v269 = vpack.c.b16 %v256, %v255
  %v270 = vpack.c.b16 %v258, %v257
  %v271 = vpack.c.b16 %v260, %v259
  %v272 = vpack.c.b16 %v262, %v261
  %v273 = vpack.c.b16 %v264, %v263
  %v274 = vpack.c.b16 %v266, %v265
  %283 = vmatprep.subr.bf16.mxu0 0
  %284 = vmatpush1.bf16.msra.mxu0 %v267
  %285 = vmatprep.subr.bf16.mxu0 0
  %286 = vmatpush1.bf16.msra.mxu0 %v268
  %287 = vmatprep.subr.bf16.mxu0 0
  %288 = vmatpush1.bf16.msra.mxu0 %v269
  %289 = vmatprep.subr.bf16.mxu0 0
  %290 = vmatpush1.bf16.msra.mxu0 %v270
  %291 = vmatprep.subr.bf16.mxu0 0
  %292 = vmatpush1.bf16.msra.mxu0 %v271
  %293 = vmatprep.subr.bf16.mxu0 0
  %294 = vmatpush1.bf16.msra.mxu0 %v272
  %295 = vmatprep.subr.bf16.mxu0 0
  %296 = vmatpush1.bf16.msra.mxu0 %v273
  %297 = vmatprep.subr.bf16.mxu0 0
  %298 = vmatpush1.bf16.msra.mxu0 %v274
  %299 = vmatprep.subr.bf16.mxu0 0
  %300 = vmatpush1.bf16.msra.mxu0 0
  %301 = vmatprep.subr.bf16.mxu0 0
  %302 = vmatpush1.bf16.msra.mxu0 0
  %303 = vmatprep.subr.bf16.mxu0 0
  %304 = vmatpush1.bf16.msra.mxu0 0
  %305 = vmatprep.subr.bf16.mxu0 0
  %306 = vmatpush1.bf16.msra.mxu0 0
  %307 = vmatprep.subr.bf16.mxu0 0
  %308 = vmatpush1.bf16.msra.mxu0 0
  %309 = vmatprep.subr.bf16.mxu0 0
  %310 = vmatpush1.bf16.msra.mxu0 0
  %311 = vmatprep.subr.bf16.mxu0 0
  %312 = vmatpush1.bf16.msra.mxu0 0
  %313 = vmatprep.subr.bf16.mxu0 0
  %314 = vmatpush1.bf16.msra.mxu0 0
  %315 = vmatprep.mubr.bf16.mxu0 0
  %316 = vmatmul.mubr.bf16.gmra.mrb[0].mxu0 %v204
  %v317 = vpop.f32.mrb[0].mxu0
  %v318 = vadd.f32 %v233, %v317
  %v319 = vpop.f32.mrb[0].mxu0
  %v320 = vpop.f32.mrb[0].mxu0
  %v321 = vadd.f32 %v233, %v320
  %v322 = vpop.f32.mrb[0].mxu0
  %323 = vmatprep.mubr.bf16.mxu0 0
  %324 = vmatmul.mubr.bf16.gmra.mrb[0].mxu0 %v205
  %v325 = vpop.f32.mrb[0].mxu0
  %v326 = vadd.f32 %v233, %v325
  %v327 = vpop.f32.mrb[0].mxu0
  %v328 = vpop.f32.mrb[0].mxu0
  %v329 = vadd.f32 %v233, %v328
  %v330 = vpop.f32.mrb[0].mxu0
  %331 = vmatprep.mubr.bf16.mxu0 0
  %332 = vmatmul.mubr.bf16.gmra.mrb[0].mxu0 %v206
  %v333 = vpop.f32.mrb[0].mxu0
  %v334 = vadd.f32 %v233, %v333
  %v335 = vpop.f32.mrb[0].mxu0
  %v336 = vpop.f32.mrb[0].mxu0
  %v337 = vadd.f32 %v233, %v336
  %v338 = vpop.f32.mrb[0].mxu0
  %339 = vmatprep.mubr.bf16.mxu0 0
  %340 = vmatmul.mubr.bf16.gmra.mrb[0].mxu0 %v207
  %v341 = vpop.f32.mrb[0].mxu0
  %v342 = vadd.f32 %v233, %v341
  %v343 = vpop.f32.mrb[0].mxu0
  %v344 = vpop.f32.mrb[0].mxu0
  %v345 = vadd.f32 %v233, %v344
  %v346 = vpop.f32.mrb[0].mxu0
  %347 = vmatprep.mubr.bf16.mxu0 0
  %348 = vmatmul.mubr.bf16.gmra.mrb[0].mxu0 %v208
  %v349 = vpop.f32.mrb[0].mxu0
  %v350 = vadd.f32 %v233, %v349
  %v351 = vpop.f32.mrb[0].mxu0
  %v352 = vpop.f32.mrb[0].mxu0
  %v353 = vadd.f32 %v233, %v352
  %v354 = vpop.f32.mrb[0].mxu0
  %355 = vmatprep.mubr.bf16.mxu0 0
  %356 = vmatmul.mubr.bf16.gmra.mrb[0].mxu0 %v209
  %v357 = vpop.f32.mrb[0].mxu0
  %v358 = vadd.f32 %v233, %v357
  %v359 = vpop.f32.mrb[0].mxu0
  %v360 = vpop.f32.mrb[0].mxu0
  %v361 = vadd.f32 %v233, %v360
  %v362 = vpop.f32.mrb[0].mxu0
  %363 = vmatprep.mubr.bf16.mxu0 0
  %364 = vmatmul.mubr.bf16.gmra.mrb[0].mxu0 %v210
  %v365 = vpop.f32.mrb[0].mxu0
  %v366 = vadd.f32 %v233, %v365
  %v367 = vpop.f32.mrb[0].mxu0
  %v368 = vpop.f32.mrb[0].mxu0
  %v369 = vadd.f32 %v233, %v368
  %v370 = vpop.f32.mrb[0].mxu0
  %371 = vmatprep.mubr.bf16.mxu0 0
  %372 = vmatmul.mubr.bf16.gmra.mrb[0].mxu0 %v211
  %v373 = vpop.f32.mrb[0].mxu0
  %v374 = vadd.f32 %v233, %v373
  %v375 = vpop.f32.mrb[0].mxu0
  %v376 = vpop.f32.mrb[0].mxu0
  %v377 = vadd.f32 %v233, %v376
  %v378 = vpop.f32.mrb[0].mxu0
  %379 = vdwg.mxu0
  %v380 = vmax.f32 %v318, 0.0
  %v381 = vmax.f32 %v321, 0.0
  %v382 = vmax.f32 %v326, 0.0
  %v383 = vmax.f32 %v329, 0.0
  %v384 = vmax.f32 %v334, 0.0
  %v385 = vmax.f32 %v337, 0.0
  %v386 = vmax.f32 %v342, 0.0
  %v387 = vmax.f32 %v345, 0.0
  %v388 = vmax.f32 %v350, 0.0
  %v389 = vmax.f32 %v353, 0.0
  %v390 = vmax.f32 %v358, 0.0
  %v391 = vmax.f32 %v361, 0.0
  %v392 = vmax.f32 %v366, 0.0
  %v393 = vmax.f32 %v369, 0.0
  %v394 = vmax.f32 %v374, 0.0
  %v395 = vmax.f32 %v377, 0.0
  %v396 = vpack.c.bf16 %v381, %v380
  %v397 = vpack.c.bf16 %v383, %v382
  %v398 = vpack.c.bf16 %v385, %v384
  %v399 = vpack.c.bf16 %v387, %v386
  %v400 = vpack.c.bf16 %v389, %v388
  %v401 = vpack.c.bf16 %v391, %v390
  %v402 = vpack.c.bf16 %v393, %v392
  %v403 = vpack.c.bf16 %v395, %v394
  %v412 = vunpack.c.l.b16 %v396
  %v413 = vunpack.c.h.b16 %v396
  %v414 = vunpack.c.l.b16 %v397
  %v415 = vunpack.c.h.b16 %v397
  %v416 = vunpack.c.l.b16 %v398
  %v417 = vunpack.c.h.b16 %v398
  %v418 = vunpack.c.l.b16 %v399
  %v419 = vunpack.c.h.b16 %v399
  %v420 = vunpack.c.l.b16 %v400
  %v421 = vunpack.c.h.b16 %v400
  %v422 = vunpack.c.l.b16 %v401
  %v423 = vunpack.c.h.b16 %v401
  %v424 = vunpack.c.l.b16 %v402
  %v425 = vunpack.c.h.b16 %v402
  %v426 = vunpack.c.l.b16 %v403
  %v427 = vunpack.c.h.b16 %v403
  %v428 = vpack.c.b16 %v412, %v412
  %v429 = vpack.c.b16 %v413, %v413
  %v430 = vpack.c.b16 %v414, %v414
  %v431 = vpack.c.b16 %v415, %v415
  %v432 = vpack.c.b16 %v416, %v416
  %v433 = vpack.c.b16 %v417, %v417
  %v434 = vpack.c.b16 %v418, %v418
  %v435 = vpack.c.b16 %v419, %v419
  %v436 = vpack.c.b16 %v420, %v420
  %v437 = vpack.c.b16 %v421, %v421
  %v438 = vpack.c.b16 %v422, %v422
  %v439 = vpack.c.b16 %v423, %v423
  %v440 = vpack.c.b16 %v424, %v424
  %v441 = vpack.c.b16 %v425, %v425
  %v442 = vpack.c.b16 %v426, %v426
  %v443 = vpack.c.b16 %v427, %v427
  %460 = vst [vmem:[%s8] sm:$0xf] %v428
  %461 = vst [vmem:[%s8 + $0x4] sm:$0xf] %v429
  %462 = vst [vmem:[%s8 + $0x8] sm:$0xf] %v430
  %463 = vst [vmem:[%s8 + $0xc] sm:$0xf] %v431
  %464 = vst [vmem:[%s8 + $0x10] sm:$0xf] %v432
  %465 = vst [vmem:[%s8 + $0x14] sm:$0xf] %v433
  %466 = vst [vmem:[%s8 + $0x18] sm:$0xf] %v434
  %467 = vst [vmem:[%s8 + $0x1c] sm:$0xf] %v435
  %468 = vst [vmem:[%s8 + $0x20] sm:$0xf] %v436
  %469 = vst [vmem:[%s8 + $0x24] sm:$0xf] %v437
  %470 = vst [vmem:[%s8 + $0x28] sm:$0xf] %v438
  %471 = vst [vmem:[%s8 + $0x2c] sm:$0xf] %v439
  %472 = vst [vmem:[%s8 + $0x30] sm:$0xf] %v440
  %473 = vst [vmem:[%s8 + $0x34] sm:$0xf] %v441
  %474 = vst [vmem:[%s8 + $0x38] sm:$0xf] %v442
  %475 = vst [vmem:[%s8 + $0x3c] sm:$0xf] %v443
  %v476 = vadd.f32 %v380, %v381
  %v477 = vadd.f32 %v476, %v382
  %v478 = vadd.f32 %v477, %v383
  %v479 = vadd.f32 %v478, %v384
  %v480 = vadd.f32 %v479, %v385
  %v481 = vadd.f32 %v480, %v386
  %v482 = vadd.f32 %v481, %v387
  %v483 = vadd.f32 %v482, %v388
  %v484 = vadd.f32 %v483, %v389
  %v485 = vadd.f32 %v484, %v390
  %v486 = vadd.f32 %v485, %v391
  %v487 = vadd.f32 %v486, %v392
  %v488 = vadd.f32 %v487, %v393
  %v489 = vadd.f32 %v488, %v394
  %v490 = vadd.f32 %v489, %v395
  %v491 = vrot.slane %v490, 4
  %v492 = vadd.f32 %v490, %v491
  %v493 = vrot.slane %v492, 2
  %v494 = vadd.f32 %v492, %v493
  %v495 = vrot.slane %v494, 1
  %v496 = vadd.f32 %v494, %v495
  %v497 = vmul.f32 %v380, %v380
  %v498 = vmul.f32 %v381, %v381
  %v499 = vmul.f32 %v382, %v382
  %v500 = vmul.f32 %v383, %v383
  %v501 = vmul.f32 %v384, %v384
  %v502 = vmul.f32 %v385, %v385
  %v503 = vmul.f32 %v386, %v386
  %v504 = vmul.f32 %v387, %v387
  %v505 = vmul.f32 %v388, %v388
  %v506 = vmul.f32 %v389, %v389
  %v507 = vmul.f32 %v390, %v390
  %v508 = vmul.f32 %v391, %v391
  %v509 = vmul.f32 %v392, %v392
  %v510 = vmul.f32 %v393, %v393
  %v511 = vmul.f32 %v394, %v394
  %v512 = vmul.f32 %v395, %v395
  %v513 = vadd.f32 %v497, %v498
  %v514 = vadd.f32 %v513, %v499
  %v515 = vadd.f32 %v514, %v500
  %v516 = vadd.f32 %v515, %v501
  %v517 = vadd.f32 %v516, %v502
  %v518 = vadd.f32 %v517, %v503
  %v519 = vadd.f32 %v518, %v504
  %v520 = vadd.f32 %v519, %v505
  %v521 = vadd.f32 %v520, %v506
  %v522 = vadd.f32 %v521, %v507
  %v523 = vadd.f32 %v522, %v508
  %v524 = vadd.f32 %v523, %v509
  %v525 = vadd.f32 %v524, %v510
  %v526 = vadd.f32 %v525, %v511
  %v527 = vadd.f32 %v526, %v512
  %v528 = vrot.slane %v527, 4
  %v529 = vadd.f32 %v527, %v528
  %v530 = vrot.slane %v529, 2
  %v531 = vadd.f32 %v529, %v530
  %v532 = vrot.slane %v531, 1
  %v533 = vadd.f32 %v531, %v532
  %vm534 = vcmask 1040384
  %v535 = vsel %vm534, %v496, %v533
  %536 = vst [vmem:[%s9] sm:$0x3] %v535
  // Predicated region
  $region34: #{convmixer_forward.8} parent=0 // pred_check
    _
  $region35: #{convmixer_forward.8} parent=0 // pred_check_branch
    %538 = sbr.rel (0) target = $region37
  $region36: #{convmixer_forward.8} parent=0 // pred_region
    _
  $region37: #{convmixer_forward.8} parent=0 // pred_fallthru
    _
  // Predicated region
  $region38: #{convmixer_forward.8} parent=0 // pred_check
    _
  $region39: #{convmixer_forward.8} parent=0 // pred_check_branch
    %540 = sbr.rel (0) target = $region41
  $region40: #{convmixer_forward.8} parent=0 // pred_region
    _
  $region41: #{convmixer_forward.8} parent=0 // pred_fallthru
    _
  // Predicated region
  $region42: #{convmixer_forward.8} parent=0 // pred_check
    _
  $region43: #{convmixer_forward.8} parent=0 // pred_check_branch
    %542 = sbr.rel (0) target = $region45
  $region44: #{convmixer_forward.8} parent=0 // pred_region
    _
  $region45: #{convmixer_forward.8} parent=0 // pred_fallthru
    _
  // Predicated region
  $region46: #{convmixer_forward.8} parent=0 // pred_check
    _
  $region47: #{convmixer_forward.8} parent=0 // pred_check_branch
    %544 = sbr.rel (0) target = $region49
  $region48: #{convmixer_forward.8} parent=0 // pred_region
    _
  $region49: #{convmixer_forward.8} parent=0 // pred_fallthru
    _

// kernel: convmixer_forward.11
$region0: #{convmixer_forward.11}
  #allocation0 [shape = 'u32[]', space=smem, size = 0x4, offset = 0x4, fixed_abs, tag = 'smem constant byte address 0x4 - core index']
  #allocation1 [shape = 'u32[144,128]{1,0:T(1,128)}', space=vmem, size = 0x12000, scoped, tag = 'internal scratch']
  #allocation2 [shape = 'f32[2,128]{1,0:T(2,128)}', space=vmem, size = 0x400, scoped, tag = 'scratch operand']
  %s0 = inlined_call_operand.vmem [shape: bf16[2,64,128], index: 0, kind: input, shape index: {}]
  %s1 = inlined_call_operand.vmem [shape: f32[1,128], index: 1, kind: input, shape index: {}]
  %s2 = inlined_call_operand.vmem [shape: f32[1,128], index: 2, kind: input, shape index: {}]
  %s3 = inlined_call_operand.vmem [shape: bf16[128,128], index: 3, kind: input, shape index: {}]
  %s4 = inlined_call_operand.vmem [shape: f32[1,128], index: 4, kind: input, shape index: {}]
  %s5 = inlined_call_operand.hbm [shape: f32[2,128], index: 5, kind: output, shape index: {}]
  %s6 = sld [smem:[#allocation0]]
  $region38: #{convmixer_forward.11} parent=0
    _
  %s8 = ssub.s32 1, %s6
  %s9 = scalar_select 0, %s8, %s6
  $region1: #{convmixer_forward.11} parent=0
    #allocation3 [shape = 'u8[1024]{0}', space=vmem, size = 0x400, scoped, tag = 'output window, operand 0, single buffered']
    #allocation4 [shape = 's32[1]{0}', space=sflag, size = 0x4, scoped, tag = 'scoped memory for convmixer_forward.11']
    %10 = vsyncpa [#allocation4], 0
    // Predicated region
    $region2: #{convmixer_forward.11} parent=1 // pred_check
      _
    $region3: #{convmixer_forward.11} parent=1 // pred_check_branch
      %12 = sbr.rel (0) target = $region5
    $region4: #{convmixer_forward.11} parent=1 // pred_region
      _
    $region5: #{convmixer_forward.11} parent=1 // pred_fallthru
      _
    // Predicated region
    $region6: #{convmixer_forward.11} parent=1 // pred_check
      _
    $region7: #{convmixer_forward.11} parent=1 // pred_check_branch
      %14 = sbr.rel (0) target = $region9
    $region8: #{convmixer_forward.11} parent=1 // pred_region
      _
    $region9: #{convmixer_forward.11} parent=1 // pred_fallthru
      _
    // Predicated region
    $region10: #{convmixer_forward.11} parent=1 // pred_check
      _
    $region11: #{convmixer_forward.11} parent=1 // pred_check_branch
      %16 = sbr.rel (0) target = $region13
    $region12: #{convmixer_forward.11} parent=1 // pred_region
      _
    $region13: #{convmixer_forward.11} parent=1 // pred_fallthru
      _
    // Predicated region
    $region14: #{convmixer_forward.11} parent=1 // pred_check
      _
    $region15: #{convmixer_forward.11} parent=1 // pred_check_branch
      %18 = sbr.rel (0) target = $region17
    $region16: #{convmixer_forward.11} parent=1 // pred_region
      _
    $region17: #{convmixer_forward.11} parent=1 // pred_fallthru
      _
    // Predicated region
    $region18: #{convmixer_forward.11} parent=1 // pred_check
      _
    $region19: #{convmixer_forward.11} parent=1 // pred_check_branch
      %20 = sbr.rel (0) target = $region21
    $region20: #{convmixer_forward.11} parent=1 // pred_region
      _
    $region21: #{convmixer_forward.11} parent=1 // pred_fallthru
      _
    %p22 = scmp.eq.s32.totalorder 0, 0
    // Predicated region
    $region22: #{convmixer_forward.11} parent=1 // pred_check
      %p23 = pneg %p22
    $region23: #{convmixer_forward.11} parent=1 // pred_check_branch
      %25 = sbr.rel (%p23) target = $region25
    $region24: #{convmixer_forward.11} parent=1 // pred_region
      %26 = vst [vmem:[#allocation2] sm:$0x3] 0.0
    $region25: #{convmixer_forward.11} parent=1 // pred_fallthru
      _
    %v27 = vld [vmem:[#allocation2] sm:$0x3]
    %v28 = vld [vmem:[%s0] sm:$0xf]
    %v29 = vld [vmem:[%s0 + $0x4] sm:$0xf]
    %v30 = vld [vmem:[%s0 + $0x8] sm:$0xf]
    %v31 = vld [vmem:[%s0 + $0xc] sm:$0xf]
    %v32 = vld [vmem:[%s0 + $0x10] sm:$0xf]
    %v33 = vld [vmem:[%s0 + $0x14] sm:$0xf]
    %v34 = vld [vmem:[%s0 + $0x18] sm:$0xf]
    %v35 = vld [vmem:[%s0 + $0x1c] sm:$0xf]
    %v36 = vld [vmem:[%s0 + $0x20] sm:$0xf]
    %v37 = vld [vmem:[%s0 + $0x24] sm:$0xf]
    %v38 = vld [vmem:[%s0 + $0x28] sm:$0xf]
    %v39 = vld [vmem:[%s0 + $0x2c] sm:$0xf]
    %v40 = vld [vmem:[%s0 + $0x30] sm:$0xf]
    %v41 = vld [vmem:[%s0 + $0x34] sm:$0xf]
    %v42 = vld [vmem:[%s0 + $0x38] sm:$0xf]
    %v43 = vld [vmem:[%s0 + $0x3c] sm:$0xf]
    %v44 = vunpack.c.l.bf16 %v28
    %v45 = vunpack.c.l.bf16 %v29
    %v46 = vunpack.c.l.bf16 %v30
    %v47 = vunpack.c.l.bf16 %v31
    %v48 = vunpack.c.l.bf16 %v32
    %v49 = vunpack.c.l.bf16 %v33
    %v50 = vunpack.c.l.bf16 %v34
    %v51 = vunpack.c.l.bf16 %v35
    %v52 = vunpack.c.l.bf16 %v36
    %v53 = vunpack.c.l.bf16 %v37
    %v54 = vunpack.c.l.bf16 %v38
    %v55 = vunpack.c.l.bf16 %v39
    %v56 = vunpack.c.l.bf16 %v40
    %v57 = vunpack.c.l.bf16 %v41
    %v58 = vunpack.c.l.bf16 %v42
    %v59 = vunpack.c.l.bf16 %v43
    %v60 = vadd.f32 %v44, %v45
    %v61 = vadd.f32 %v60, %v46
    %v62 = vadd.f32 %v61, %v47
    %v63 = vadd.f32 %v62, %v48
    %v64 = vadd.f32 %v63, %v49
    %v65 = vadd.f32 %v64, %v50
    %v66 = vadd.f32 %v65, %v51
    %v67 = vrot.slane %v66, 4
    %v68 = vadd.f32 %v66, %v67
    %v69 = vrot.slane %v68, 2
    %v70 = vadd.f32 %v68, %v69
    %v71 = vrot.slane %v70, 1
    %v72 = vadd.f32 %v70, %v71
    %v73 = vadd.f32 %v52, %v53
    %v74 = vadd.f32 %v73, %v54
    %v75 = vadd.f32 %v74, %v55
    %v76 = vadd.f32 %v75, %v56
    %v77 = vadd.f32 %v76, %v57
    %v78 = vadd.f32 %v77, %v58
    %v79 = vadd.f32 %v78, %v59
    %v80 = vrot.slane %v79, 4
    %v81 = vadd.f32 %v79, %v80
    %v82 = vrot.slane %v81, 2
    %v83 = vadd.f32 %v81, %v82
    %v84 = vrot.slane %v83, 1
    %v85 = vadd.f32 %v83, %v84
    %vm88 = vcmask 1041409
    %v89 = vsel %vm88, %v85, %v72
    %v91 = vadd.f32 %v27, %v89
    %92 = vst [vmem:[#allocation2] sm:$0x3] %v91
    // Predicated region
    $region26: #{convmixer_forward.11} parent=1 // pred_check
      %p93 = pneg %p22
    $region27: #{convmixer_forward.11} parent=1 // pred_check_branch
      %95 = sbr.rel (%p93) target = $region29
    $region28: #{convmixer_forward.11} parent=1 // pred_region
      %v96 = vld [vmem:[#allocation2] sm:$0x3]
      %v97 = vmul.f32 %v96, 0.015625
      %v98 = vld [vmem:[%s1] sm:$0x1]
      %v100 = vlaneseq
      %v101 = vshrl.u32 %v100, 7
      %v102 = vsub.s32 0, %v101
      %v103 = vrot.slane %v98, %v102
      %v105 = vmul.f32 %v97, %v103
      %v106 = vld [vmem:[%s2] sm:$0x1]
      %v108 = vlaneseq
      %v109 = vshrl.u32 %v108, 7
      %v110 = vsub.s32 0, %v109
      %v111 = vrot.slane %v106, %v110
      %v113 = vadd.f32 %v105, %v111
      %v114 = vpack.c.bf16 %v113, %v113
      %v115 = vld [vmem:[%s3] sm:$0xf]
      %v116 = vld [vmem:[%s3 + $0x4] sm:$0xf]
      %v117 = vld [vmem:[%s3 + $0x8] sm:$0xf]
      %v118 = vld [vmem:[%s3 + $0xc] sm:$0xf]
      %v119 = vld [vmem:[%s3 + $0x10] sm:$0xf]
      %v120 = vld [vmem:[%s3 + $0x14] sm:$0xf]
      %v121 = vld [vmem:[%s3 + $0x18] sm:$0xf]
      %v122 = vld [vmem:[%s3 + $0x1c] sm:$0xf]
      %v123 = vld [vmem:[%s3 + $0x20] sm:$0xf]
      %v124 = vld [vmem:[%s3 + $0x24] sm:$0xf]
      %v125 = vld [vmem:[%s3 + $0x28] sm:$0xf]
      %v126 = vld [vmem:[%s3 + $0x2c] sm:$0xf]
      %v127 = vld [vmem:[%s3 + $0x30] sm:$0xf]
      %v128 = vld [vmem:[%s3 + $0x34] sm:$0xf]
      %v129 = vld [vmem:[%s3 + $0x38] sm:$0xf]
      %v130 = vld [vmem:[%s3 + $0x3c] sm:$0xf]
      %v131 = vld [vmem:[%s4] sm:$0x1]
      %v133 = vlaneseq
      %v134 = vshrl.u32 %v133, 7
      %v135 = vsub.s32 0, %v134
      %v136 = vrot.slane %v131, %v135
      %v154 = vunpack.c.l.b16 %v115
      %v155 = vunpack.c.l.b16 %v116
      %v156 = vunpack.c.l.b16 %v117
      %v157 = vunpack.c.l.b16 %v118
      %v158 = vunpack.c.l.b16 %v119
      %v159 = vunpack.c.l.b16 %v120
      %v160 = vunpack.c.l.b16 %v121
      %v161 = vunpack.c.l.b16 %v122
      %v162 = vunpack.c.l.b16 %v123
      %v163 = vunpack.c.l.b16 %v124
      %v164 = vunpack.c.l.b16 %v125
      %v165 = vunpack.c.l.b16 %v126
      %v166 = vunpack.c.l.b16 %v127
      %v167 = vunpack.c.l.b16 %v128
      %v168 = vunpack.c.l.b16 %v129
      %v169 = vunpack.c.l.b16 %v130
      %v170 = vpack.c.b16 %v155, %v154
      %v171 = vpack.c.b16 %v157, %v156
      %v172 = vpack.c.b16 %v159, %v158
      %v173 = vpack.c.b16 %v161, %v160
      %v174 = vpack.c.b16 %v163, %v162
      %v175 = vpack.c.b16 %v165, %v164
      %v176 = vpack.c.b16 %v167, %v166
      %v177 = vpack.c.b16 %v169, %v168
      %186 = vmatprep.subr.bf16.mxu0 0
      %187 = vmatpush1.bf16.msra.mxu0 %v170
      %188 = vmatprep.subr.bf16.mxu0 0
      %189 = vmatpush1.bf16.msra.mxu0 %v171
      %190 = vmatprep.subr.bf16.mxu0 0
      %191 = vmatpush1.bf16.msra.mxu0 %v172
      %192 = vmatprep.subr.bf16.mxu0 0
      %193 = vmatpush1.bf16.msra.mxu0 %v173
      %194 = vmatprep.subr.bf16.mxu0 0
      %195 = vmatpush1.bf16.msra.mxu0 %v174
      %196 = vmatprep.subr.bf16.mxu0 0
      %197 = vmatpush1.bf16.msra.mxu0 %v175
      %198 = vmatprep.subr.bf16.mxu0 0
      %199 = vmatpush1.bf16.msra.mxu0 %v176
      %200 = vmatprep.subr.bf16.mxu0 0
      %201 = vmatpush1.bf16.msra.mxu0 %v177
      %202 = vmatprep.subr.bf16.mxu0 0
      %203 = vmatpush1.bf16.msra.mxu0 0
      %204 = vmatprep.subr.bf16.mxu0 0
      %205 = vmatpush1.bf16.msra.mxu0 0
      %206 = vmatprep.subr.bf16.mxu0 0
      %207 = vmatpush1.bf16.msra.mxu0 0
      %208 = vmatprep.subr.bf16.mxu0 0
      %209 = vmatpush1.bf16.msra.mxu0 0
      %210 = vmatprep.subr.bf16.mxu0 0
      %211 = vmatpush1.bf16.msra.mxu0 0
      %212 = vmatprep.subr.bf16.mxu0 0
      %213 = vmatpush1.bf16.msra.mxu0 0
      %214 = vmatprep.subr.bf16.mxu0 0
      %215 = vmatpush1.bf16.msra.mxu0 0
      %216 = vmatprep.subr.bf16.mxu0 0
      %217 = vmatpush1.bf16.msra.mxu0 0
      %218 = vmatprep.mubr.bf16.mxu0 0
      %219 = vmatmul.mubr.bf16.gmra.mrb[0].mxu0 %v114
      %v220 = vpop.f32.mrb[0].mxu0
      %v221 = vadd.f32 %v136, %v220
      %v222 = vpop.f32.mrb[0].mxu0
      %v223 = vpop.f32.mrb[0].mxu0
      %v224 = vpop.f32.mrb[0].mxu0
      %225 = vdwg.mxu0
      %226 = vst [vmem:[#allocation3] sm:$0x3] %v221
    $region29: #{convmixer_forward.11} parent=1 // pred_fallthru
      _
    // Predicated region
    $region30: #{convmixer_forward.11} parent=1 // pred_check
      _
    $region31: #{convmixer_forward.11} parent=1 // pred_check_branch
      %228 = sbr.rel (0) target = $region33
    $region32: #{convmixer_forward.11} parent=1 // pred_region
      %s230 = ssub.s32 32, 32
      %231 = vsyncadd [#allocation4], %s230
      %s233 = sshll.u32 [#allocation3], 4
      %s234 = int_to_ptr.vmem [resolvable:$true] %s233
      %236 = dma.vmem_to_hbm [thread:$0]  %s234, 32, %s5, [#allocation4]
    $region33: #{convmixer_forward.11} parent=1 // pred_fallthru
      _
    // Predicated region
    $region34: #{convmixer_forward.11} parent=1 // pred_check
      _
    $region35: #{convmixer_forward.11} parent=1 // pred_check_branch
      %238 = sbr.rel (0) target = $region37
    $region36: #{convmixer_forward.11} parent=1 // pred_region
      %239 = dma.done [#allocation4], 32
    $region37: #{convmixer_forward.11} parent=1 // pred_fallthru
      _
    %240 = vsyncpa [#allocation4], 1

// kernel: convmixer_forward.7
$region0: #{convmixer_forward.7}
  #allocation0 [shape = 'u32[]', space=smem, size = 0x4, offset = 0x4, fixed_abs, tag = 'smem constant byte address 0x4 - core index']
  #allocation1 [shape = 'u32[144,128]{1,0:T(1,128)}', space=vmem, size = 0x12000, scoped, tag = 'internal scratch']
  %s0 = inlined_call_operand.vmem [shape: bf16[2,8,8,128], index: 0, kind: input, shape index: {}]
  %s1 = inlined_call_operand.vmem [shape: f32[1,128], index: 1, kind: input, shape index: {}]
  %s2 = inlined_call_operand.vmem [shape: f32[1,128], index: 2, kind: input, shape index: {}]
  %s3 = inlined_call_operand.vmem [shape: f32[9,128], index: 3, kind: input, shape index: {}]
  %s4 = inlined_call_operand.vmem [shape: f32[1,128], index: 4, kind: input, shape index: {}]
  %s5 = inlined_call_operand.vmem [shape: bf16[2,8,8,128], index: 5, kind: output, shape index: {0}]
  %s6 = inlined_call_operand.vmem [shape: f32[2,2,128], index: 6, kind: output, shape index: {1}]
  %7 = xla_tuple %s5, %s6
  %s8 = sld [smem:[#allocation0]]
  $region61: #{convmixer_forward.7} parent=0
    _
  %s10 = ssub.s32 1, %s8
  %s11 = scalar_select 0, %s10, %s8
  loop: start=0, step=1, limit=4
  $region2: #{convmixer_forward.7} parent=0 // loop_pre_header
    _
  $region3: #{convmixer_forward.7} parent=0 // loop_header
    %s13 = sphi 0, %s17
    %p14 = scmp.ge.s32.totalorder %s13, 4
    %s23 = sphi 0, %s25
    %s26 = sphi 0, %s23
    %s27 = sphi 0, %s26
    %s43 = sphi 0, %s27
    %s47 = sphi 0, %s47
    %s49 = sphi 0, %s47
    %s50 = sphi 0, %s49
    %s64 = sphi 0, %s50
    %s68 = sphi 0, %s68
    %s70 = sphi 0, %s68
    %s71 = sphi 0, %s70
    %s85 = sphi 0, %s71
    %s89 = sphi 0, %s89
    %s91 = sphi 0, %s89
    %s92 = sphi 0, %s91
    %s106 = sphi 0, %s92
    %s110 = sphi 0, %s110
    %s112 = sphi 0, %s110
    %s113 = sphi 0, %s112
    %s127 = sphi 0, %s113
    %s133 = sphi 0, %s135
    %s136 = sphi 0, %s133
    %s137 = sphi 0, %s136
    %s153 = sphi 0, %s137
    %s159 = sphi 0, %s161
    %s162 = sphi 0, %s159
    %s163 = sphi 0, %s162
    %s179 = sphi 0, %s163
  $region4: #{convmixer_forward.7} parent=0 // loop_header_branch
    %16 = sbr.rel (%p14) target = $region8
  $region5: #{convmixer_forward.7} parent=0 // loop_body
    %s18 = ssub.s32 %s13, 1
    %s19 = ssub.s32 %s13, 2
    %s20 = sadd.s32 %s13, 1
    %s21 = ssub.s32 %s13, %s20
    %p22 = scmp.eq.s32.totalorder %s21, 0
    %s24 = sadd.s32 %s23, 1
    %s25 = scalar_select %p22, %s23, %s24
    %p28 = pneg %p22
    %p29 = scmp.eq.s32.totalorder %s13, 1
    %p30 = por %p28, %p29
    %p31 = scmp.ne.s32.totalorder %s23, %s26
    %p32 = scmp.eq.s32.totalorder %s13, 0
    %p33 = por %p31, %p32
    %p34 = scmp.ne.s32.totalorder %s23, %s26
    %p35 = scmp.eq.s32.totalorder %s18, 1
    %p36 = por %p34, %p35
    %p37 = scmp.ne.s32.totalorder %s26, %s27
    %p38 = scmp.eq.s32.totalorder %s18, 0
    %p39 = por %p37, %p38
    %p40 = scmp.ne.s32.totalorder %s26, %s27
    %p41 = scmp.eq.s32.totalorder %s19, 1
    %p42 = por %p40, %p41
    %p44 = scmp.ne.s32.totalorder %s27, %s43
    %p45 = scmp.eq.s32.totalorder %s19, 0
    %p46 = por %p44, %p45
    %s48 = sadd.s32 %s47, 1
    %p51 = scmp.eq.s32.totalorder %s13, 1
    %p52 = scmp.ne.s32.totalorder %s47, %s49
    %p53 = scmp.eq.s32.totalorder %s13, 0
    %p54 = por %p52, %p53
    %p55 = scmp.ne.s32.totalorder %s47, %s49
    %p56 = scmp.eq.s32.totalorder %s18, 1
    %p57 = por %p55, %p56
    %p58 = scmp.ne.s32.totalorder %s49, %s50
    %p59 = scmp.eq.s32.totalorder %s18, 0
    %p60 = por %p58, %p59
    %p61 = scmp.ne.s32.totalorder %s49, %s50
    %p62 = scmp.eq.s32.totalorder %s19, 1
    %p63 = por %p61, %p62
    %p65 = scmp.ne.s32.totalorder %s50, %s64
    %p66 = scmp.eq.s32.totalorder %s19, 0
    %p67 = por %p65, %p66
    %s69 = sadd.s32 %s68, 1
    %p72 = scmp.eq.s32.totalorder %s13, 1
    %p73 = scmp.ne.s32.totalorder %s68, %s70
    %p74 = scmp.eq.s32.totalorder %s13, 0
    %p75 = por %p73, %p74
    %p76 = scmp.ne.s32.totalorder %s68, %s70
    %p77 = scmp.eq.s32.totalorder %s18, 1
    %p78 = por %p76, %p77
    %p79 = scmp.ne.s32.totalorder %s70, %s71
    %p80 = scmp.eq.s32.totalorder %s18, 0
    %p81 = por %p79, %p80
    %p82 = scmp.ne.s32.totalorder %s70, %s71
    %p83 = scmp.eq.s32.totalorder %s19, 1
    %p84 = por %p82, %p83
    %p86 = scmp.ne.s32.totalorder %s71, %s85
    %p87 = scmp.eq.s32.totalorder %s19, 0
    %p88 = por %p86, %p87
    %s90 = sadd.s32 %s89, 1
    %p93 = scmp.eq.s32.totalorder %s13, 1
    %p94 = scmp.ne.s32.totalorder %s89, %s91
    %p95 = scmp.eq.s32.totalorder %s13, 0
    %p96 = por %p94, %p95
    %p97 = scmp.ne.s32.totalorder %s89, %s91
    %p98 = scmp.eq.s32.totalorder %s18, 1
    %p99 = por %p97, %p98
    %p100 = scmp.ne.s32.totalorder %s91, %s92
    %p101 = scmp.eq.s32.totalorder %s18, 0
    %p102 = por %p100, %p101
    %p103 = scmp.ne.s32.totalorder %s91, %s92
    %p104 = scmp.eq.s32.totalorder %s19, 1
    %p105 = por %p103, %p104
    %p107 = scmp.ne.s32.totalorder %s92, %s106
    %p108 = scmp.eq.s32.totalorder %s19, 0
    %p109 = por %p107, %p108
    %s111 = sadd.s32 %s110, 1
    %p114 = scmp.eq.s32.totalorder %s13, 1
    %p115 = scmp.ne.s32.totalorder %s110, %s112
    %p116 = scmp.eq.s32.totalorder %s13, 0
    %p117 = por %p115, %p116
    %p118 = scmp.ne.s32.totalorder %s110, %s112
    %p119 = scmp.eq.s32.totalorder %s18, 1
    %p120 = por %p118, %p119
    %p121 = scmp.ne.s32.totalorder %s112, %s113
    %p122 = scmp.eq.s32.totalorder %s18, 0
    %p123 = por %p121, %p122
    %p124 = scmp.ne.s32.totalorder %s112, %s113
    %p125 = scmp.eq.s32.totalorder %s19, 1
    %p126 = por %p124, %p125
    %p128 = scmp.ne.s32.totalorder %s113, %s127
    %p129 = scmp.eq.s32.totalorder %s19, 0
    %p130 = por %p128, %p129
    %s131 = ssub.s32 %s13, %s20
    %p132 = scmp.eq.s32.totalorder %s131, 0
    %s134 = sadd.s32 %s133, 1
    %s135 = scalar_select %p132, %s133, %s134
    %p138 = pneg %p132
    %p139 = scmp.eq.s32.totalorder %s13, 1
    %p140 = por %p138, %p139
    %p141 = scmp.ne.s32.totalorder %s133, %s136
    %p142 = scmp.eq.s32.totalorder %s13, 0
    %p143 = por %p141, %p142
    %p144 = scmp.ne.s32.totalorder %s133, %s136
    %p145 = scmp.eq.s32.totalorder %s18, 1
    %p146 = por %p144, %p145
    %p147 = scmp.ne.s32.totalorder %s136, %s137
    %p148 = scmp.eq.s32.totalorder %s18, 0
    %p149 = por %p147, %p148
    %p150 = scmp.ne.s32.totalorder %s136, %s137
    %p151 = scmp.eq.s32.totalorder %s19, 1
    %p152 = por %p150, %p151
    %p154 = scmp.ne.s32.totalorder %s137, %s153
    %p155 = scmp.eq.s32.totalorder %s19, 0
    %p156 = por %p154, %p155
    %s157 = ssub.s32 %s13, %s20
    %p158 = scmp.eq.s32.totalorder %s157, 0
    %s160 = sadd.s32 %s159, 1
    %s161 = scalar_select %p158, %s159, %s160
    %p164 = pneg %p158
    %p165 = scmp.eq.s32.totalorder %s13, 1
    %p166 = por %p164, %p165
    %p167 = scmp.ne.s32.totalorder %s159, %s162
    %p168 = scmp.eq.s32.totalorder %s13, 0
    %p169 = por %p167, %p168
    %p170 = scmp.ne.s32.totalorder %s159, %s162
    %p171 = scmp.eq.s32.totalorder %s18, 1
    %p172 = por %p170, %p171
    %p173 = scmp.ne.s32.totalorder %s162, %s163
    %p174 = scmp.eq.s32.totalorder %s18, 0
    %p175 = por %p173, %p174
    %p176 = scmp.ne.s32.totalorder %s162, %s163
    %p177 = scmp.eq.s32.totalorder %s19, 1
    %p178 = por %p176, %p177
    %p180 = scmp.ne.s32.totalorder %s163, %s179
    %p181 = scmp.eq.s32.totalorder %s19, 0
    %p182 = por %p180, %p181
    %p183 = scmp.le.s32.totalorder 1, %s13
    %p184 = scmp.lt.s32.totalorder %s13, 3
    %p185 = pnand %p183, %p184
    %p186 = pneg %p185
    // Predicated region
    $region9: #{convmixer_forward.7} parent=5 // pred_check
      _
    $region10: #{convmixer_forward.7} parent=5 // pred_check_branch
      %188 = sbr.rel (%p185) target = $region12
    $region11: #{convmixer_forward.7} parent=5 // pred_region
      %s189 = ssub.s32 %s13, 1
      // Predicated region
      $region13: #{convmixer_forward.7} parent=11 // pred_check
        %p190 = pneg %p60
      $region14: #{convmixer_forward.7} parent=11 // pred_check_branch
        %192 = sbr.rel (%p190) target = $region16
      $region15: #{convmixer_forward.7} parent=11 // pred_region
        _
      $region16: #{convmixer_forward.7} parent=11 // pred_fallthru
        _
      // Predicated region
      $region17: #{convmixer_forward.7} parent=11 // pred_check
        %p193 = pneg %p81
      $region18: #{convmixer_forward.7} parent=11 // pred_check_branch
        %195 = sbr.rel (%p193) target = $region20
      $region19: #{convmixer_forward.7} parent=11 // pred_region
        _
      $region20: #{convmixer_forward.7} parent=11 // pred_fallthru
        _
      // Predicated region
      $region21: #{convmixer_forward.7} parent=11 // pred_check
        %p196 = pneg %p102
      $region22: #{convmixer_forward.7} parent=11 // pred_check_branch
        %198 = sbr.rel (%p196) target = $region24
      $region23: #{convmixer_forward.7} parent=11 // pred_region
        _
      $region24: #{convmixer_forward.7} parent=11 // pred_fallthru
        _
      // Predicated region
      $region25: #{convmixer_forward.7} parent=11 // pred_check
        %p199 = pneg %p123
      $region26: #{convmixer_forward.7} parent=11 // pred_check_branch
        %201 = sbr.rel (%p199) target = $region28
      $region27: #{convmixer_forward.7} parent=11 // pred_region
        _
      $region28: #{convmixer_forward.7} parent=11 // pred_fallthru
        _
    $region12: #{convmixer_forward.7} parent=5 // pred_fallthru
      _
    %p202 = scmp.lt.s32.totalorder %s13, 2
    // Predicated region
    $region29: #{convmixer_forward.7} parent=5 // pred_check
      %p203 = pneg %p202
    $region30: #{convmixer_forward.7} parent=5 // pred_check_branch
      %205 = sbr.rel (%p203) target = $region32
    $region31: #{convmixer_forward.7} parent=5 // pred_region
      // Predicated region
      $region33: #{convmixer_forward.7} parent=31 // pred_check
        %p206 = pneg %p33
      $region34: #{convmixer_forward.7} parent=31 // pred_check_branch
        %208 = sbr.rel (%p206) target = $region36
      $region35: #{convmixer_forward.7} parent=31 // pred_region
        %p209 = scmp.lt.s32.totalorder %s13, 1
        %s210 = scalar_select %p209, %s13, 1
        %s211 = smul.addr %s210, 8
        %s212 = smul.addr %s211, 4
        %s213 = scalar_lea.vmem %s0, %s212
      $region36: #{convmixer_forward.7} parent=31 // pred_fallthru
        _
    $region32: #{convmixer_forward.7} parent=5 // pred_fallthru
      _
    %p214 = scmp.le.s32.totalorder 1, %s13
    %p215 = scmp.lt.s32.totalorder %s13, 3
    %p216 = pnand %p214, %p215
    %p217 = pneg %p216
    // Predicated region
    $region37: #{convmixer_forward.7} parent=5 // pred_check
      _
    $region38: #{convmixer_forward.7} parent=5 // pred_check_branch
      %219 = sbr.rel (%p216) target = $region40
    $region39: #{convmixer_forward.7} parent=5 // pred_region
      %s220 = ssub.s32 %s13, 1
      %p221 = scmp.lt.s32.totalorder %s18, 1
      %s222 = scalar_select %p221, %s18, 1
      %s223 = smul.addr %s222, 8
      %s224 = smul.addr %s223, 4
      %s225 = scalar_lea.vmem %s0, %s224
      %p226 = pneg %p39
      %p227 = pneg %p36
      %p228 = pneg %p60
      %p229 = pneg %p57
      %p230 = pneg %p81
      %p231 = pneg %p78
      %p232 = pneg %p102
      %p233 = pneg %p99
      %p234 = pneg %p123
      %p235 = pneg %p120
      %p236 = pneg %p149
      %p237 = pneg %p146
      %p238 = scmp.lt.s32.totalorder %s18, 1
      %s239 = scalar_select %p238, %s18, 1
      %s240 = smul.addr %s239, 8
      %s241 = smul.addr %s240, 4
      %s242 = scalar_lea.vmem %s5, %s241
      %p243 = pneg %p175
      %p244 = pneg %p172
      %p245 = scmp.lt.s32.totalorder %s18, 1
      %s246 = scalar_select %p245, %s18, 1
      %s247 = smul.addr %s246, 2
      %s248 = scalar_lea.vmem %s6, %s247
      %p249 = scmp.lt.s32.totalorder %s18, 1
      %s250 = scalar_select %p249, %s18, 1
      %s251 = smul.addr %s250, 8
      %s252 = smul.addr %s251, 4
      %s253 = scalar_lea.vmem %s0, %s252
      %p254 = scmp.lt.s32.totalorder %s18, 1
      %s255 = scalar_select %p254, %s18, 1
      %s256 = smul.addr %s255, 8
      %s257 = smul.addr %s256, 4
      %s258 = scalar_lea.vmem %s5, %s257
      %p259 = scmp.lt.s32.totalorder %s18, 1
      %s260 = scalar_select %p259, %s18, 1
      %s261 = smul.addr %s260, 2
      %s262 = scalar_lea.vmem %s6, %s261
      %v263 = vld [vmem:[%s253] sm:$0xf]
      %v264 = vld [vmem:[%s253 + $0x4] sm:$0xf]
      %v265 = vld [vmem:[%s253 + $0x8] sm:$0xf]
      %v266 = vld [vmem:[%s253 + $0xc] sm:$0xf]
      %v267 = vld [vmem:[%s253 + $0x10] sm:$0xf]
      %v268 = vld [vmem:[%s253 + $0x14] sm:$0xf]
      %v269 = vld [vmem:[%s253 + $0x18] sm:$0xf]
      %v270 = vld [vmem:[%s253 + $0x1c] sm:$0xf]
      %v271 = vunpack.c.l.bf16 %v263
      %v272 = vunpack.c.l.bf16 %v264
      %v273 = vunpack.c.l.bf16 %v265
      %v274 = vunpack.c.l.bf16 %v266
      %v275 = vunpack.c.l.bf16 %v267
      %v276 = vunpack.c.l.bf16 %v268
      %v277 = vunpack.c.l.bf16 %v269
      %v278 = vunpack.c.l.bf16 %v270
      %v279 = vld [vmem:[%s1] sm:$0x1]
      %v281 = vlaneseq
      %v282 = vshrl.u32 %v281, 7
      %v283 = vsub.s32 0, %v282
      %v284 = vrot.slane %v279, %v283
      %v286 = vmul.f32 %v271, %v284
      %v287 = vmul.f32 %v272, %v284
      %v288 = vmul.f32 %v273, %v284
      %v289 = vmul.f32 %v274, %v284
      %v290 = vmul.f32 %v275, %v284
      %v291 = vmul.f32 %v276, %v284
      %v292 = vmul.f32 %v277, %v284
      %v293 = vmul.f32 %v278, %v284
      %v294 = vld [vmem:[%s2] sm:$0x1]
      %v296 = vlaneseq
      %v297 = vshrl.u32 %v296, 7
      %v298 = vsub.s32 0, %v297
      %v299 = vrot.slane %v294, %v298
      %v301 = vadd.f32 %v286, %v299
      %v302 = vadd.f32 %v287, %v299
      %v303 = vadd.f32 %v288, %v299
      %v304 = vadd.f32 %v289, %v299
      %v305 = vadd.f32 %v290, %v299
      %v306 = vadd.f32 %v291, %v299
      %v307 = vadd.f32 %v292, %v299
      %v308 = vadd.f32 %v293, %v299
      %v309 = vld [vmem:[%s3] sm:$0xff]
      %v310 = vld [vmem:[%s3 + $0x8] sm:$0x1]
      %v311 = vld [vmem:[%s4] sm:$0x1]
      %v312 = vlaneseq
      %v313 = vshrl.u32 %v312, 7
      %v314 = vadd.s32 %v313, 8
      %v315 = vadd.s32 %v313, 16
      %v316 = vadd.s32 %v313, 24
      %v317 = vadd.s32 %v313, 32
      %v318 = vadd.s32 %v313, 40
      %v319 = vadd.s32 %v313, 48
      %v320 = vadd.s32 %v313, 56
      %v321 = vadd.s32 %v313, 64
      %v322 = vadd.s32 %v313, 72
      %vm323 = vcmp.lt.s32.totalorder %v313, 0
      %v324 = vsub.s32 0, %v313
      %v325 = vsel %vm323, %v324, %v313
      %v326 = vshrl.u32 %v325, 3
      %v327 = vand.u32 %v325, 7
      %v328 = vsub.s32 0, %v327
      %v329 = vsel %vm323, %v328, %v327
      %vm330 = vcmp.lt.s32.totalorder %v314, 0
      %v331 = vsub.s32 0, %v314
      %v332 = vsel %vm330, %v331, %v314
      %v333 = vshrl.u32 %v332, 3
      %v334 = vand.u32 %v332, 7
      %v335 = vsub.s32 0, %v334
      %v336 = vsel %vm330, %v335, %v334
      %vm337 = vcmp.lt.s32.totalorder %v315, 0
      %v338 = vsub.s32 0, %v315
      %v339 = vsel %vm337, %v338, %v315
      %v340 = vshrl.u32 %v339, 3
      %v341 = vand.u32 %v339, 7
      %v342 = vsub.s32 0, %v341
      %v343 = vsel %vm337, %v342, %v341
      %vm344 = vcmp.lt.s32.totalorder %v316, 0
      %v345 = vsub.s32 0, %v316
      %v346 = vsel %vm344, %v345, %v316
      %v347 = vshrl.u32 %v346, 3
      %v348 = vand.u32 %v346, 7
      %v349 = vsub.s32 0, %v348
      %v350 = vsel %vm344, %v349, %v348
      %vm351 = vcmp.lt.s32.totalorder %v317, 0
      %v352 = vsub.s32 0, %v317
      %v353 = vsel %vm351, %v352, %v317
      %v354 = vshrl.u32 %v353, 3
      %v355 = vand.u32 %v353, 7
      %v356 = vsub.s32 0, %v355
      %v357 = vsel %vm351, %v356, %v355
      %vm358 = vcmp.lt.s32.totalorder %v318, 0
      %v359 = vsub.s32 0, %v318
      %v360 = vsel %vm358, %v359, %v318
      %v361 = vshrl.u32 %v360, 3
      %v362 = vand.u32 %v360, 7
      %v363 = vsub.s32 0, %v362
      %v364 = vsel %vm358, %v363, %v362
      %vm365 = vcmp.lt.s32.totalorder %v319, 0
      %v366 = vsub.s32 0, %v319
      %v367 = vsel %vm365, %v366, %v319
      %v368 = vshrl.u32 %v367, 3
      %v369 = vand.u32 %v367, 7
      %v370 = vsub.s32 0, %v369
      %v371 = vsel %vm365, %v370, %v369
      %vm372 = vcmp.lt.s32.totalorder %v320, 0
      %v373 = vsub.s32 0, %v320
      %v374 = vsel %vm372, %v373, %v320
      %v375 = vshrl.u32 %v374, 3
      %v376 = vand.u32 %v374, 7
      %v377 = vsub.s32 0, %v376
      %v378 = vsel %vm372, %v377, %v376
      %vm379 = vcmp.lt.s32.totalorder %v321, 0
      %v380 = vsub.s32 0, %v321
      %v381 = vsel %vm379, %v380, %v321
      %v382 = vshrl.u32 %v381, 3
      %v383 = vand.u32 %v381, 7
      %v384 = vsub.s32 0, %v383
      %v385 = vsel %vm379, %v384, %v383
      %vm386 = vcmp.lt.s32.totalorder %v322, 0
      %v387 = vsub.s32 0, %v322
      %v388 = vsel %vm386, %v387, %v322
      %v389 = vshrl.u32 %v388, 3
      %v390 = vand.u32 %v388, 7
      %v391 = vsub.s32 0, %v390
      %v392 = vsel %vm386, %v391, %v390
      %vm393 = vcmp.ne.s32.totalorder %v329, 0
      %vm394 = vcmp.ne.s32.totalorder %v336, 0
      %vm395 = vcmp.ne.s32.totalorder %v343, 0
      %vm396 = vcmp.ne.s32.totalorder %v350, 0
      %vm397 = vcmp.ne.s32.totalorder %v357, 0
      %vm398 = vcmp.ne.s32.totalorder %v364, 0
      %vm399 = vcmp.ne.s32.totalorder %v371, 0
      %vm400 = vcmp.ne.s32.totalorder %v378, 0
      %vm401 = vcmp.ne.s32.totalorder %v385, 0
      %vm402 = vcmp.ne.s32.totalorder %v392, 0
      %vm403 = vcmp.lt.s32.totalorder %v329, 0
      %vm404 = vcmp.lt.s32.totalorder %v336, 0
      %vm405 = vcmp.lt.s32.totalorder %v343, 0
      %vm406 = vcmp.lt.s32.totalorder %v350, 0
      %vm407 = vcmp.lt.s32.totalorder %v357, 0
      %vm408 = vcmp.lt.s32.totalorder %v364, 0
      %vm409 = vcmp.lt.s32.totalorder %v371, 0
      %vm410 = vcmp.lt.s32.totalorder %v378, 0
      %vm411 = vcmp.lt.s32.totalorder %v385, 0
      %vm412 = vcmp.lt.s32.totalorder %v392, 0
      %vm413 = vmand %vm403, %vm393
      %vm414 = vmand %vm404, %vm394
      %vm415 = vmand %vm405, %vm395
      %vm416 = vmand %vm406, %vm396
      %vm417 = vmand %vm407, %vm397
      %vm418 = vmand %vm408, %vm398
      %vm419 = vmand %vm409, %vm399
      %vm420 = vmand %vm410, %vm400
      %vm421 = vmand %vm411, %vm401
      %vm422 = vmand %vm412, %vm402
      %v423 = vadd.s32 %v329, 8
      %v424 = vadd.s32 %v336, 8
      %v425 = vadd.s32 %v343, 8
      %v426 = vadd.s32 %v350, 8
      %v427 = vadd.s32 %v357, 8
      %v428 = vadd.s32 %v364, 8
      %v429 = vadd.s32 %v371, 8
      %v430 = vadd.s32 %v378, 8
      %v431 = vadd.s32 %v385, 8
      %v432 = vadd.s32 %v392, 8
      %v433 = vsel %vm413, %v423, %v329
      %v434 = vsel %vm414, %v424, %v336
      %v435 = vsel %vm415, %v425, %v343
      %v436 = vsel %vm416, %v426, %v350
      %v437 = vsel %vm417, %v427, %v357
      %v438 = vsel %vm418, %v428, %v364
      %v439 = vsel %vm419, %v429, %v371
      %v440 = vsel %vm420, %v430, %v378
      %v441 = vsel %vm421, %v431, %v385
      %v442 = vsel %vm422, %v432, %v392
      %v443 = vrot.slane %v301, 7
      %v444 = vrot.slane %v302, 7
      %v445 = vrot.slane %v303, 7
      %v446 = vrot.slane %v304, 7
      %v447 = vrot.slane %v305, 7
      %v448 = vrot.slane %v306, 7
      %v449 = vrot.slane %v307, 7
      %v450 = vrot.slane %v308, 7
      %vm451 = vcmp.lt.s32.totalorder %v313, 1
      %v452 = vsel %vm451, %v450, 0.0
      %v453 = vsel %vm451, %v449, %v450
      %v454 = vsel %vm451, %v448, %v449
      %v455 = vsel %vm451, %v447, %v448
      %v456 = vsel %vm451, %v446, %v447
      %v457 = vsel %vm451, %v445, %v446
      %v458 = vsel %vm451, %v444, %v445
      %v459 = vsel %vm451, %v443, %v444
      %v460 = vsel %vm451, 0.0, %v443
      %v461 = vadd.s32 %v433, 4294967295
      %v462 = vadd.s32 %v434, 4294967295
      %v463 = vadd.s32 %v435, 4294967295
      %v464 = vadd.s32 %v436, 4294967295
      %v465 = vadd.s32 %v437, 4294967295
      %v466 = vadd.s32 %v438, 4294967295
      %v467 = vadd.s32 %v439, 4294967295
      %v468 = vadd.s32 %v440, 4294967295
      %v469 = vadd.s32 %v441, 4294967295
      %v470 = vadd.s32 %v442, 4294967295
      %vm471 = vcmp.ge.s32.totalorder %v461, 0
      %vm472 = vcmp.ge.s32.totalorder %v462, 0
      %vm473 = vcmp.ge.s32.totalorder %v463, 0
      %vm474 = vcmp.ge.s32.totalorder %v464, 0
      %vm475 = vcmp.ge.s32.totalorder %v465, 0
      %vm476 = vcmp.ge.s32.totalorder %v466, 0
      %vm477 = vcmp.ge.s32.totalorder %v467, 0
      %vm478 = vcmp.ge.s32.totalorder %v468, 0
      %vm479 = vcmp.ge.s32.totalorder %v469, 0
      %vm480 = vcmp.ge.s32.totalorder %v470, 0
      %vm481 = vcmp.lt.s32.totalorder %v461, 8
      %vm482 = vcmp.lt.s32.totalorder %v462, 8
      %vm483 = vcmp.lt.s32.totalorder %v463, 8
      %vm484 = vcmp.lt.s32.totalorder %v464, 8
      %vm485 = vcmp.lt.s32.totalorder %v465, 8
      %vm486 = vcmp.lt.s32.totalorder %v466, 8
      %vm487 = vcmp.lt.s32.totalorder %v467, 8
      %vm488 = vcmp.lt.s32.totalorder %v468, 8
      %vm489 = vcmp.lt.s32.totalorder %v469, 8
      %vm490 = vcmp.lt.s32.totalorder %v470, 8
      %vm491 = vmand %vm471, %vm481
      %vm492 = vmand %vm472, %vm482
      %vm493 = vmand %vm473, %vm483
      %vm494 = vmand %vm474, %vm484
      %vm495 = vmand %vm475, %vm485
      %vm496 = vmand %vm476, %vm486
      %vm497 = vmand %vm477, %vm487
      %vm498 = vmand %vm478, %vm488
      %vm499 = vmand %vm479, %vm489
      %vm500 = vmand %vm480, %vm490
      %v501 = vsel %vm491, 1, 0
      %v502 = vsel %vm492, 1, 0
      %v503 = vsel %vm493, 1, 0
      %v504 = vsel %vm494, 1, 0
      %v505 = vsel %vm495, 1, 0
      %v506 = vsel %vm496, 1, 0
      %v507 = vsel %vm497, 1, 0
      %v508 = vsel %vm498, 1, 0
      %v509 = vsel %vm499, 1, 0
      %v510 = vsel %vm500, 1, 0
      %vm511 = vcmp.eq.s32.totalorder %v501, 1
      %vm512 = vcmp.eq.s32.totalorder %v502, 1
      %vm513 = vcmp.eq.s32.totalorder %v503, 1
      %vm514 = vcmp.eq.s32.totalorder %v504, 1
      %vm515 = vcmp.eq.s32.totalorder %v505, 1
      %vm516 = vcmp.eq.s32.totalorder %v506, 1
      %vm517 = vcmp.eq.s32.totalorder %v507, 1
      %vm518 = vcmp.eq.s32.totalorder %v508, 1
      %vm519 = vcmp.eq.s32.totalorder %v509, 1
      %vm520 = vcmp.eq.s32.totalorder %v510, 1
      %v521 = vsel %vm511, 0.0, 0.0
      %v522 = vsel %vm512, %v460, 0.0
      %v523 = vsel %vm513, %v459, 0.0
      %v524 = vsel %vm514, %v458, 0.0
      %v525 = vsel %vm515, %v457, 0.0
      %v526 = vsel %vm516, %v456, 0.0
      %v527 = vsel %vm517, %v455, 0.0
      %v528 = vsel %vm518, %v454, 0.0
      %v529 = vsel %vm519, %v453, 0.0
      %v530 = vsel %vm520, %v452, 0.0
      %v531 = vlaneseq
      %v532 = vshrl.u32 %v531, 7
      %v533 = vsub.s32 0, %v532
      %v534 = vrot.slane %v309, %v533
      %v535 = vmul.f32 %v521, %v534
      %v536 = vmul.f32 %v522, %v534
      %v537 = vmul.f32 %v523, %v534
      %v538 = vmul.f32 %v524, %v534
      %v539 = vmul.f32 %v525, %v534
      %v540 = vmul.f32 %v526, %v534
      %v541 = vmul.f32 %v527, %v534
      %v542 = vmul.f32 %v528, %v534
      %v543 = vadd.f32 %v535, 0.0
      %v544 = vadd.f32 %v536, 0.0
      %v545 = vadd.f32 %v537, 0.0
      %v546 = vadd.f32 %v538, 0.0
      %v547 = vadd.f32 %v539, 0.0
      %v548 = vadd.f32 %v540, 0.0
      %v549 = vadd.f32 %v541, 0.0
      %v550 = vadd.f32 %v542, 0.0
      %v551 = vlaneseq
      %v552 = vshrl.u32 %v551, 7
      %v553 = vsub.s32 3, %v552
      %v554 = vrot.slane %v309, %v553
      %v555 = vmul.f32 %v522, %v554
      %v556 = vmul.f32 %v523, %v554
      %v557 = vmul.f32 %v524, %v554
      %v558 = vmul.f32 %v525, %v554
      %v559 = vmul.f32 %v526, %v554
      %v560 = vmul.f32 %v527, %v554
      %v561 = vmul.f32 %v528, %v554
      %v562 = vmul.f32 %v529, %v554
      %v563 = vadd.f32 %v543, %v555
      %v564 = vadd.f32 %v544, %v556
      %v565 = vadd.f32 %v545, %v557
      %v566 = vadd.f32 %v546, %v558
      %v567 = vadd.f32 %v547, %v559
      %v568 = vadd.f32 %v548, %v560
      %v569 = vadd.f32 %v549, %v561
      %v570 = vadd.f32 %v550, %v562
      %v571 = vlaneseq
      %v572 = vshrl.u32 %v571, 7
      %v573 = vsub.s32 6, %v572
      %v574 = vrot.slane %v309, %v573
      %v575 = vmul.f32 %v523, %v574
      %v576 = vmul.f32 %v524, %v574
      %v577 = vmul.f32 %v525, %v574
      %v578 = vmul.f32 %v526, %v574
      %v579 = vmul.f32 %v527, %v574
      %v580 = vmul.f32 %v528, %v574
      %v581 = vmul.f32 %v529, %v574
      %v582 = vmul.f32 %v530, %v574
      %v583 = vadd.f32 %v563, %v575
      %v584 = vadd.f32 %v564, %v576
      %v585 = vadd.f32 %v565, %v577
      %v586 = vadd.f32 %v566, %v578
      %v587 = vadd.f32 %v567, %v579
      %v588 = vadd.f32 %v568, %v580
      %v589 = vadd.f32 %v569, %v581
      %v590 = vadd.f32 %v570, %v582
      %v591 = vlaneseq
      %v592 = vshrl.u32 %v591, 7
      %v593 = vsub.s32 1, %v592
      %v594 = vrot.slane %v309, %v593
      %v595 = vmul.f32 %v594, 0.0
      %v596 = vmul.f32 %v301, %v594
      %v597 = vmul.f32 %v302, %v594
      %v598 = vmul.f32 %v303, %v594
      %v599 = vmul.f32 %v304, %v594
      %v600 = vmul.f32 %v305, %v594
      %v601 = vmul.f32 %v306, %v594
      %v602 = vmul.f32 %v307, %v594
      %v603 = vadd.f32 %v583, %v595
      %v604 = vadd.f32 %v584, %v596
      %v605 = vadd.f32 %v585, %v597
      %v606 = vadd.f32 %v586, %v598
      %v607 = vadd.f32 %v587, %v599
      %v608 = vadd.f32 %v588, %v600
      %v609 = vadd.f32 %v589, %v601
      %v610 = vadd.f32 %v590, %v602
      %v611 = vlaneseq
      %v612 = vshrl.u32 %v611, 7
      %v613 = vsub.s32 4, %v612
      %v614 = vrot.slane %v309, %v613
      %v615 = vmul.f32 %v301, %v614
      %v616 = vmul.f32 %v302, %v614
      %v617 = vmul.f32 %v303, %v614
      %v618 = vmul.f32 %v304, %v614
      %v619 = vmul.f32 %v305, %v614
      %v620 = vmul.f32 %v306, %v614
      %v621 = vmul.f32 %v307, %v614
      %v622 = vmul.f32 %v308, %v614
      %v623 = vadd.f32 %v603, %v615
      %v624 = vadd.f32 %v604, %v616
      %v625 = vadd.f32 %v605, %v617
      %v626 = vadd.f32 %v606, %v618
      %v627 = vadd.f32 %v607, %v619
      %v628 = vadd.f32 %v608, %v620
      %v629 = vadd.f32 %v609, %v621
      %v630 = vadd.f32 %v610, %v622
      %v631 = vlaneseq
      %v632 = vshrl.u32 %v631, 7
      %v633 = vsub.s32 7, %v632
      %v634 = vrot.slane %v309, %v633
      %v635 = vmul.f32 %v302, %v634
      %v636 = vmul.f32 %v303, %v634
      %v637 = vmul.f32 %v304, %v634
      %v638 = vmul.f32 %v305, %v634
      %v639 = vmul.f32 %v306, %v634
      %v640 = vmul.f32 %v307, %v634
      %v641 = vmul.f32 %v308, %v634
      %v642 = vmul.f32 %v634, 0.0
      %v643 = vadd.f32 %v623, %v635
      %v644 = vadd.f32 %v624, %v636
      %v645 = vadd.f32 %v625, %v637
      %v646 = vadd.f32 %v626, %v638
      %v647 = vadd.f32 %v627, %v639
      %v648 = vadd.f32 %v628, %v640
      %v649 = vadd.f32 %v629, %v641
      %v650 = vadd.f32 %v630, %v642
      %v651 = vrot.slane %v301, 1
      %v652 = vrot.slane %v302, 1
      %v653 = vrot.slane %v303, 1
      %v654 = vrot.slane %v304, 1
      %v655 = vrot.slane %v305, 1
      %v656 = vrot.slane %v306, 1
      %v657 = vrot.slane %v307, 1
      %v658 = vrot.slane %v308, 1
      %vm659 = vcmp.lt.s32.totalorder %v313, 7
      %v660 = vsel %vm659, %v658, 0.0
      %v661 = vsel %vm659, %v657, %v658
      %v662 = vsel %vm659, %v656, %v657
      %v663 = vsel %vm659, %v655, %v656
      %v664 = vsel %vm659, %v654, %v655
      %v665 = vsel %vm659, %v653, %v654
      %v666 = vsel %vm659, %v652, %v653
      %v667 = vsel %vm659, %v651, %v652
      %v668 = vsel %vm659, 0.0, %v651
      %v669 = vadd.s32 %v433, 1
      %v670 = vadd.s32 %v434, 1
      %v671 = vadd.s32 %v435, 1
      %v672 = vadd.s32 %v436, 1
      %v673 = vadd.s32 %v437, 1
      %v674 = vadd.s32 %v438, 1
      %v675 = vadd.s32 %v439, 1
      %v676 = vadd.s32 %v440, 1
      %v677 = vadd.s32 %v441, 1
      %v678 = vadd.s32 %v442, 1
      %vm679 = vcmp.ge.s32.totalorder %v669, 0
      %vm680 = vcmp.ge.s32.totalorder %v670, 0
      %vm681 = vcmp.ge.s32.totalorder %v671, 0
      %vm682 = vcmp.ge.s32.totalorder %v672, 0
      %vm683 = vcmp.ge.s32.totalorder %v673, 0
      %vm684 = vcmp.ge.s32.totalorder %v674, 0
      %vm685 = vcmp.ge.s32.totalorder %v675, 0
      %vm686 = vcmp.ge.s32.totalorder %v676, 0
      %vm687 = vcmp.ge.s32.totalorder %v677, 0
      %vm688 = vcmp.ge.s32.totalorder %v678, 0
      %vm689 = vcmp.lt.s32.totalorder %v669, 8
      %vm690 = vcmp.lt.s32.totalorder %v670, 8
      %vm691 = vcmp.lt.s32.totalorder %v671, 8
      %vm692 = vcmp.lt.s32.totalorder %v672, 8
      %vm693 = vcmp.lt.s32.totalorder %v673, 8
      %vm694 = vcmp.lt.s32.totalorder %v674, 8
      %vm695 = vcmp.lt.s32.totalorder %v675, 8
      %vm696 = vcmp.lt.s32.totalorder %v676, 8
      %vm697 = vcmp.lt.s32.totalorder %v677, 8
      %vm698 = vcmp.lt.s32.totalorder %v678, 8
      %vm699 = vmand %vm679, %vm689
      %vm700 = vmand %vm680, %vm690
      %vm701 = vmand %vm681, %vm691
      %vm702 = vmand %vm682, %vm692
      %vm703 = vmand %vm683, %vm693
      %vm704 = vmand %vm684, %vm694
      %vm705 = vmand %vm685, %vm695
      %vm706 = vmand %vm686, %vm696
      %vm707 = vmand %vm687, %vm697
      %vm708 = vmand %vm688, %vm698
      %v709 = vsel %vm699, 1, 0
      %v710 = vsel %vm700, 1, 0
      %v711 = vsel %vm701, 1, 0
      %v712 = vsel %vm702, 1, 0
      %v713 = vsel %vm703, 1, 0
      %v714 = vsel %vm704, 1, 0
      %v715 = vsel %vm705, 1, 0
      %v716 = vsel %vm706, 1, 0
      %v717 = vsel %vm707, 1, 0
      %v718 = vsel %vm708, 1, 0
      %vm719 = vcmp.eq.s32.totalorder %v709, 1
      %vm720 = vcmp.eq.s32.totalorder %v710, 1
      %vm721 = vcmp.eq.s32.totalorder %v711, 1
      %vm722 = vcmp.eq.s32.totalorder %v712, 1
      %vm723 = vcmp.eq.s32.totalorder %v713, 1
      %vm724 = vcmp.eq.s32.totalorder %v714, 1
      %vm725 = vcmp.eq.s32.totalorder %v715, 1
      %vm726 = vcmp.eq.s32.totalorder %v716, 1
      %vm727 = vcmp.eq.s32.totalorder %v717, 1
      %vm728 = vcmp.eq.s32.totalorder %v718, 1
      %v729 = vsel %vm719, %v668, 0.0
      %v730 = vsel %vm720, %v667, 0.0
      %v731 = vsel %vm721, %v666, 0.0
      %v732 = vsel %vm722, %v665, 0.0
      %v733 = vsel %vm723, %v664, 0.0
      %v734 = vsel %vm724, %v663, 0.0
      %v735 = vsel %vm725, %v662, 0.0
      %v736 = vsel %vm726, %v661, 0.0
      %v737 = vsel %vm727, %v660, 0.0
      %v738 = vsel %vm728, 0.0, 0.0
      %v739 = vlaneseq
      %v740 = vshrl.u32 %v739, 7
      %v741 = vsub.s32 2, %v740
      %v742 = vrot.slane %v309, %v741
      %v743 = vmul.f32 %v729, %v742
      %v744 = vmul.f32 %v730, %v742
      %v745 = vmul.f32 %v731, %v742
      %v746 = vmul.f32 %v732, %v742
      %v747 = vmul.f32 %v733, %v742
      %v748 = vmul.f32 %v734, %v742
      %v749 = vmul.f32 %v735, %v742
      %v750 = vmul.f32 %v736, %v742
      %v751 = vadd.f32 %v643, %v743
      %v752 = vadd.f32 %v644, %v744
      %v753 = vadd.f32 %v645, %v745
      %v754 = vadd.f32 %v646, %v746
      %v755 = vadd.f32 %v647, %v747
      %v756 = vadd.f32 %v648, %v748
      %v757 = vadd.f32 %v649, %v749
      %v758 = vadd.f32 %v650, %v750
      %v759 = vlaneseq
      %v760 = vshrl.u32 %v759, 7
      %v761 = vsub.s32 5, %v760
      %v762 = vrot.slane %v309, %v761
      %v763 = vmul.f32 %v730, %v762
      %v764 = vmul.f32 %v731, %v762
      %v765 = vmul.f32 %v732, %v762
      %v766 = vmul.f32 %v733, %v762
      %v767 = vmul.f32 %v734, %v762
      %v768 = vmul.f32 %v735, %v762
      %v769 = vmul.f32 %v736, %v762
      %v770 = vmul.f32 %v737, %v762
      %v771 = vadd.f32 %v751, %v763
      %v772 = vadd.f32 %v752, %v764
      %v773 = vadd.f32 %v753, %v765
      %v774 = vadd.f32 %v754, %v766
      %v775 = vadd.f32 %v755, %v767
      %v776 = vadd.f32 %v756, %v768
      %v777 = vadd.f32 %v757, %v769
      %v778 = vadd.f32 %v758, %v770
      %v779 = vlaneseq
      %v780 = vshrl.u32 %v779, 7
      %v781 = vsub.s32 0, %v780
      %v782 = vrot.slane %v310, %v781
      %v783 = vmul.f32 %v731, %v782
      %v784 = vmul.f32 %v732, %v782
      %v785 = vmul.f32 %v733, %v782
      %v786 = vmul.f32 %v734, %v782
      %v787 = vmul.f32 %v735, %v782
      %v788 = vmul.f32 %v736, %v782
      %v789 = vmul.f32 %v737, %v782
      %v790 = vmul.f32 %v738, %v782
      %v791 = vadd.f32 %v771, %v783
      %v792 = vadd.f32 %v772, %v784
      %v793 = vadd.f32 %v773, %v785
      %v794 = vadd.f32 %v774, %v786
      %v795 = vadd.f32 %v775, %v787
      %v796 = vadd.f32 %v776, %v788
      %v797 = vadd.f32 %v777, %v789
      %v798 = vadd.f32 %v778, %v790
      %v800 = vlaneseq
      %v801 = vshrl.u32 %v800, 7
      %v802 = vsub.s32 0, %v801
      %v803 = vrot.slane %v311, %v802
      %v805 = vadd.f32 %v791, %v803
      %v806 = vadd.f32 %v792, %v803
      %v807 = vadd.f32 %v793, %v803
      %v808 = vadd.f32 %v794, %v803
      %v809 = vadd.f32 %v795, %v803
      %v810 = vadd.f32 %v796, %v803
      %v811 = vadd.f32 %v797, %v803
      %v812 = vadd.f32 %v798, %v803
      %v813 = vmax.f32 %v805, 0.0
      %v814 = vmax.f32 %v806, 0.0
      %v815 = vmax.f32 %v807, 0.0
      %v816 = vmax.f32 %v808, 0.0
      %v817 = vmax.f32 %v809, 0.0
      %v818 = vmax.f32 %v810, 0.0
      %v819 = vmax.f32 %v811, 0.0
      %v820 = vmax.f32 %v812, 0.0
      %v821 = vpack.c.bf16 %v813, %v813
      %v822 = vpack.c.bf16 %v814, %v814
      %v823 = vpack.c.bf16 %v815, %v815
      %v824 = vpack.c.bf16 %v816, %v816
      %v825 = vpack.c.bf16 %v817, %v817
      %v826 = vpack.c.bf16 %v818, %v818
      %v827 = vpack.c.bf16 %v819, %v819
      %v828 = vpack.c.bf16 %v820, %v820
      %829 = vst [vmem:[%s258] sm:$0xf] %v821
      %830 = vst [vmem:[%s258 + $0x4] sm:$0xf] %v822
      %831 = vst [vmem:[%s258 + $0x8] sm:$0xf] %v823
      %832 = vst [vmem:[%s258 + $0xc] sm:$0xf] %v824
      %833 = vst [vmem:[%s258 + $0x10] sm:$0xf] %v825
      %834 = vst [vmem:[%s258 + $0x14] sm:$0xf] %v826
      %835 = vst [vmem:[%s258 + $0x18] sm:$0xf] %v827
      %836 = vst [vmem:[%s258 + $0x1c] sm:$0xf] %v828
      %vm837 = vcmask 523264
      %v839 = vsel %vm837, 1.0, 0
      %841 = vmatprep.subr.mxu0 0.0
      %842 = vmatpush1.msra.mxu0 %v813
      %843 = vmatprep.subr.mxu0 0.0
      %844 = vmatpush1.msra.mxu0 %v814
      %845 = vmatprep.subr.mxu0 0.0
      %846 = vmatpush1.msra.mxu0 %v815
      %847 = vmatprep.subr.mxu0 0.0
      %848 = vmatpush1.msra.mxu0 %v816
      %849 = vmatprep.subr.mxu0 0.0
      %850 = vmatpush1.msra.mxu0 %v817
      %851 = vmatprep.subr.mxu0 0.0
      %852 = vmatpush1.msra.mxu0 %v818
      %853 = vmatprep.subr.mxu0 0.0
      %854 = vmatpush1.msra.mxu0 %v819
      %855 = vmatprep.subr.mxu0 0.0
      %856 = vmatpush1.msra.mxu0 %v820
      %857 = vmatprep.subr.mxu0 0.0
      %858 = vmatpush1.msra.mxu0 0.0
      %859 = vmatprep.subr.mxu0 0.0
      %860 = vmatpush1.msra.mxu0 0.0
      %861 = vmatprep.subr.mxu0 0.0
      %862 = vmatpush1.msra.mxu0 0.0
      %863 = vmatprep.subr.mxu0 0.0
      %864 = vmatpush1.msra.mxu0 0.0
      %865 = vmatprep.subr.mxu0 0.0
      %866 = vmatpush1.msra.mxu0 0.0
      %867 = vmatprep.subr.mxu0 0.0
      %868 = vmatpush1.msra.mxu0 0.0
      %869 = vmatprep.subr.mxu0 0.0
      %870 = vmatpush1.msra.mxu0 0.0
      %871 = vmatprep.subr.mxu0 0.0
      %872 = vmatpush1.msra.mxu0 0.0
      %873 = vmatprep.subr.mxu0 0.0
      %874 = vmatpush1.msra.mxu0 0.0
      %875 = vmatprep.subr.mxu0 0.0
      %876 = vmatpush1.msra.mxu0 0.0
      %877 = vmatprep.subr.mxu0 0.0
      %878 = vmatpush1.msra.mxu0 0.0
      %879 = vmatprep.subr.mxu0 0.0
      %880 = vmatpush1.msra.mxu0 0.0
      %881 = vmatprep.subr.mxu0 0.0
      %882 = vmatpush1.msra.mxu0 0.0
      %883 = vmatprep.subr.mxu0 0.0
      %884 = vmatpush1.msra.mxu0 0.0
      %885 = vmatprep.subr.mxu0 0.0
      %886 = vmatpush1.msra.mxu0 0.0
      %887 = vmatprep.subr.mxu0 0.0
      %888 = vmatpush1.msra.mxu0 0.0
      %889 = vmatprep.subr.mxu0 0.0
      %890 = vmatpush1.msra.mxu0 0.0
      %891 = vmatprep.subr.mxu0 0.0
      %892 = vmatpush1.msra.mxu0 0.0
      %893 = vmatprep.subr.mxu0 0.0
      %894 = vmatpush1.msra.mxu0 0.0
      %895 = vmatprep.subr.mxu0 0.0
      %896 = vmatpush1.msra.mxu0 0.0
      %897 = vmatprep.subr.mxu0 0.0
      %898 = vmatpush1.msra.mxu0 0.0
      %899 = vmatprep.subr.mxu0 0.0
      %900 = vmatpush1.msra.mxu0 0.0
      %901 = vmatprep.subr.mxu0 0.0
      %902 = vmatpush1.msra.mxu0 0.0
      %903 = vmatprep.subr.mxu0 0.0
      %904 = vmatpush1.msra.mxu0 0.0
      %905 = vmatprep.mubr.f32.mxu0 0.0
      %906 = vmatmul.mubr.f32.gmra.mrb[0].mxu0 %v839
      %v907 = vpop.f32.mrb[0].mxu0
      %v908 = vadd.f32 0.0, %v907
      %v909 = vpop.f32.mrb[0].mxu0
      %910 = vdwg.mxu0
      %v911 = vmul.f32 %v813, %v813
      %v912 = vmul.f32 %v814, %v814
      %v913 = vmul.f32 %v815, %v815
      %v914 = vmul.f32 %v816, %v816
      %v915 = vmul.f32 %v817, %v817
      %v916 = vmul.f32 %v818, %v818
      %v917 = vmul.f32 %v819, %v819
      %v918 = vmul.f32 %v820, %v820
      %919 = vmatprep.subr.mxu0 0.0
      %920 = vmatpush1.msra.mxu0 %v911
      %921 = vmatprep.subr.mxu0 0.0
      %922 = vmatpush1.msra.mxu0 %v912
      %923 = vmatprep.subr.mxu0 0.0
      %924 = vmatpush1.msra.mxu0 %v913
      %925 = vmatprep.subr.mxu0 0.0
      %926 = vmatpush1.msra.mxu0 %v914
      %927 = vmatprep.subr.mxu0 0.0
      %928 = vmatpush1.msra.mxu0 %v915
      %929 = vmatprep.subr.mxu0 0.0
      %930 = vmatpush1.msra.mxu0 %v916
      %931 = vmatprep.subr.mxu0 0.0
      %932 = vmatpush1.msra.mxu0 %v917
      %933 = vmatprep.subr.mxu0 0.0
      %934 = vmatpush1.msra.mxu0 %v918
      %935 = vmatprep.subr.mxu0 0.0
      %936 = vmatpush1.msra.mxu0 0.0
      %937 = vmatprep.subr.mxu0 0.0
      %938 = vmatpush1.msra.mxu0 0.0
      %939 = vmatprep.subr.mxu0 0.0
      %940 = vmatpush1.msra.mxu0 0.0
      %941 = vmatprep.subr.mxu0 0.0
      %942 = vmatpush1.msra.mxu0 0.0
      %943 = vmatprep.subr.mxu0 0.0
      %944 = vmatpush1.msra.mxu0 0.0
      %945 = vmatprep.subr.mxu0 0.0
      %946 = vmatpush1.msra.mxu0 0.0
      %947 = vmatprep.subr.mxu0 0.0
      %948 = vmatpush1.msra.mxu0 0.0
      %949 = vmatprep.subr.mxu0 0.0
      %950 = vmatpush1.msra.mxu0 0.0
      %951 = vmatprep.subr.mxu0 0.0
      %952 = vmatpush1.msra.mxu0 0.0
      %953 = vmatprep.subr.mxu0 0.0
      %954 = vmatpush1.msra.mxu0 0.0
      %955 = vmatprep.subr.mxu0 0.0
      %956 = vmatpush1.msra.mxu0 0.0
      %957 = vmatprep.subr.mxu0 0.0
      %958 = vmatpush1.msra.mxu0 0.0
      %959 = vmatprep.subr.mxu0 0.0
      %960 = vmatpush1.msra.mxu0 0.0
      %961 = vmatprep.subr.mxu0 0.0
      %962 = vmatpush1.msra.mxu0 0.0
      %963 = vmatprep.subr.mxu0 0.0
      %964 = vmatpush1.msra.mxu0 0.0
      %965 = vmatprep.subr.mxu0 0.0
      %966 = vmatpush1.msra.mxu0 0.0
      %967 = vmatprep.subr.mxu0 0.0
      %968 = vmatpush1.msra.mxu0 0.0
      %969 = vmatprep.subr.mxu0 0.0
      %970 = vmatpush1.msra.mxu0 0.0
      %971 = vmatprep.subr.mxu0 0.0
      %972 = vmatpush1.msra.mxu0 0.0
      %973 = vmatprep.subr.mxu0 0.0
      %974 = vmatpush1.msra.mxu0 0.0
      %975 = vmatprep.subr.mxu0 0.0
      %976 = vmatpush1.msra.mxu0 0.0
      %977 = vmatprep.subr.mxu0 0.0
      %978 = vmatpush1.msra.mxu0 0.0
      %979 = vmatprep.subr.mxu0 0.0
      %980 = vmatpush1.msra.mxu0 0.0
      %981 = vmatprep.subr.mxu0 0.0
      %982 = vmatpush1.msra.mxu0 0.0
      %983 = vmatprep.mubr.f32.mxu0 0.0
      %984 = vmatmul.mubr.f32.gmra.mrb[0].mxu0 %v839
      %v985 = vpop.f32.mrb[0].mxu0
      %v986 = vadd.f32 0.0, %v985
      %v987 = vpop.f32.mrb[0].mxu0
      %988 = vdwg.mxu0
      %v990 = vrot.slane %v986, 7
      %vm992 = vcmask 1040384
      %v993 = vsel %vm992, %v908, %v990
      %994 = vst [vmem:[%s262] sm:$0x3] %v993
      %p995 = scmp.lt.s32.totalorder %s18, 1
      %s996 = scalar_select %p995, %s18, 1
      %s997 = smul.addr %s996, 8
      %s998 = smul.addr %s997, 4
      %s999 = scalar_lea.vmem %s5, %s998
      %p1000 = scmp.lt.s32.totalorder %s18, 1
      %s1001 = scalar_select %p1000, %s18, 1
      %s1002 = smul.addr %s1001, 2
      %s1003 = scalar_lea.vmem %s6, %s1002
      // Predicated region
      $region41: #{convmixer_forward.7} parent=39 // pred_check
        %p1004 = pneg %p146
      $region42: #{convmixer_forward.7} parent=39 // pred_check_branch
        %1006 = sbr.rel (%p1004) target = $region44
      $region43: #{convmixer_forward.7} parent=39 // pred_region
        _
      $region44: #{convmixer_forward.7} parent=39 // pred_fallthru
        _
      // Predicated region
      $region45: #{convmixer_forward.7} parent=39 // pred_check
        %p1007 = pneg %p172
      $region46: #{convmixer_forward.7} parent=39 // pred_check_branch
        %1009 = sbr.rel (%p1007) target = $region48
      $region47: #{convmixer_forward.7} parent=39 // pred_region
        _
      $region48: #{convmixer_forward.7} parent=39 // pred_fallthru
        _
    $region40: #{convmixer_forward.7} parent=5 // pred_fallthru
      _
    %p1010 = scmp.le.s32.totalorder 2, %s13
    // Predicated region
    $region49: #{convmixer_forward.7} parent=5 // pred_check
      %p1011 = pneg %p1010
    $region50: #{convmixer_forward.7} parent=5 // pred_check_branch
      %1013 = sbr.rel (%p1011) target = $region52
    $region51: #{convmixer_forward.7} parent=5 // pred_region
      %s1014 = ssub.s32 %s13, 2
      // Predicated region
      $region53: #{convmixer_forward.7} parent=51 // pred_check
        %p1015 = pneg %p152
      $region54: #{convmixer_forward.7} parent=51 // pred_check_branch
        %1017 = sbr.rel (%p1015) target = $region56
      $region55: #{convmixer_forward.7} parent=51 // pred_region
        %p1018 = scmp.lt.s32.totalorder %s19, 1
        %s1019 = scalar_select %p1018, %s19, 1
        %s1020 = smul.addr %s1019, 8
        %s1021 = smul.addr %s1020, 4
        %s1022 = scalar_lea.vmem %s5, %s1021
      $region56: #{convmixer_forward.7} parent=51 // pred_fallthru
        _
      // Predicated region
      $region57: #{convmixer_forward.7} parent=51 // pred_check
        %p1023 = pneg %p178
      $region58: #{convmixer_forward.7} parent=51 // pred_check_branch
        %1025 = sbr.rel (%p1023) target = $region60
      $region59: #{convmixer_forward.7} parent=51 // pred_region
        %p1026 = scmp.lt.s32.totalorder %s19, 1
        %s1027 = scalar_select %p1026, %s19, 1
        %s1028 = smul.addr %s1027, 2
        %s1029 = scalar_lea.vmem %s6, %s1028
      $region60: #{convmixer_forward.7} parent=51 // pred_fallthru
        _
    $region52: #{convmixer_forward.7} parent=5 // pred_fallthru
      _
  $region6: #{convmixer_forward.7} parent=0 // loop_footer
    %s17 = sadd.s32 1, %s13
  $region7: #{convmixer_forward.7} parent=0 // loop_footer_branch
    %12 = sbr.rel target = $region3
  $region8: #{convmixer_forward.7} parent=0 // loop_exit
    _

</llo_original>
